<compile_context>
chip_gen: v6e
topology: v6e:2x2x1
jax: 0.10.0
libtpu: 0.0.40
codegen_flags: <defaults>
</compile_context>

<pallas_src>
import functools
import math

import numpy as np
import jax
import jax.numpy as jnp
from jax.experimental import pallas as pl
from jax.experimental.pallas import tpu as pltpu


def _round_up(v, m):
    return ((v + m - 1) // m) * m


def _pick_tile(total, maxt, unit):
    """Largest multiple of `unit` that divides `total`, capped near `maxt`."""
    t = min(total, max(unit, (maxt // unit) * unit))
    t = (t // unit) * unit
    while total % t:
        t -= unit
    return t


# ----------------------------------------------------------------------------
# Kernel 1: batched NoiseWeighting / ensemble_feature (grid over classes)
# ----------------------------------------------------------------------------
def _noise_weighting_kernel(counts_ref, x_ref, w1_ref, b1_ref, w2_ref, b2_ref,
                            out_ref, *, n_sample, in_features):
    c = pl.program_id(0)
    xf = x_ref[0].astype(jnp.float32)                    # (G_pad, n_sample*in)
    w1 = w1_ref[...].astype(jnp.float32)                 # (512, n_sample*in)
    w2 = w2_ref[...].astype(jnp.float32)                 # (n_sample, 512)

    # Linear(D,512) -> Linear(512,n) -> ReLU -> Sigmoid, no in-kernel transposes.
    h = jax.lax.dot_general(xf, w1, dimension_numbers=(((1,), (1,)), ((), ())),
                            preferred_element_type=jnp.float32) + b1_ref[...]
    o = jax.lax.dot_general(h, w2, dimension_numbers=(((1,), (1,)), ((), ())),
                            preferred_element_type=jnp.float32) + b2_ref[...]
    score = jax.nn.sigmoid(jnp.maximum(o, 0.0))          # (G_pad, n_sample)

    # score-weighted sum over samples; zero-padded groups contribute exactly 0.
    acc = jnp.zeros((xf.shape[0], in_features), jnp.float32)
    for j in range(n_sample):                            # small static unroll
        acc = acc + score[:, j:j + 1] * xf[:, j * in_features:(j + 1) * in_features]

    denom = jnp.float32(n_sample) * counts_ref[c].astype(jnp.float32)
    proto = jnp.sum(acc, axis=0, keepdims=True) / denom  # (1, in_features)

    # (num_classes, in_features) output block is resident across the whole grid;
    # each step writes its own row via a select (no dynamic sublane store).
    rows = jax.lax.broadcasted_iota(jnp.int32, out_ref.shape, 0)

    @pl.when(c == 0)
    def _init():
        out_ref[...] = jnp.zeros_like(out_ref)

    out_ref[...] = jnp.where(rows == c, proto, out_ref[...])


def noise_weighting_batched(counts, x_groups, w1, b1, w2, b2, *, n_sample,
                            in_features):
    """counts: (C,) int32 groups-per-class; x_groups: (C, G_pad, n_sample*in)."""
    C, g_pad, D = x_groups.shape
    kernel = functools.partial(_noise_weighting_kernel,
                               n_sample=n_sample, in_features=in_features)
    grid_spec = pltpu.PrefetchScalarGridSpec(
        num_scalar_prefetch=1,
        grid=(C,),
        in_specs=[
            pl.BlockSpec((1, g_pad, D), lambda c, counts: (c, 0, 0)),
            pl.BlockSpec(w1.shape, lambda c, counts: (0, 0)),
            pl.BlockSpec((1, w1.shape[0]), lambda c, counts: (0, 0)),
            pl.BlockSpec(w2.shape, lambda c, counts: (0, 0)),
            pl.BlockSpec((1, w2.shape[0]), lambda c, counts: (0, 0)),
        ],
        out_specs=pl.BlockSpec((C, in_features), lambda c, counts: (0, 0)),
    )
    return pl.pallas_call(
        kernel,
        out_shape=jax.ShapeDtypeStruct((C, in_features), jnp.float32),
        grid_spec=grid_spec,
        compiler_params=pltpu.CompilerParams(dimension_semantics=("arbitrary",)),
    )(counts, x_groups, w1, b1.reshape(1, -1), w2, b2.reshape(1, -1))


# ----------------------------------------------------------------------------
# Kernel 2: row-normalize the weight once per forward (hoisted out of ArcFace)
# ----------------------------------------------------------------------------
def _normalize_rows_kernel(w_ref, o_ref):
    w = w_ref[...].astype(jnp.float32)
    # F.normalize(eps=1e-12): 1/max(||w||,1e-12) == rsqrt(max(sumsq, 1e-24))
    inv = jax.lax.rsqrt(jnp.maximum(jnp.sum(w * w, axis=-1, keepdims=True), 1e-24))
    o_ref[...] = (w * inv).astype(o_ref.dtype)


def normalize_rows_call(w, out_dtype=jnp.bfloat16):
    R, IN = w.shape
    tw = _pick_tile(R, 256, 128)
    return pl.pallas_call(
        _normalize_rows_kernel,
        out_shape=jax.ShapeDtypeStruct((R, IN), out_dtype),
        grid=(R // tw,),
        in_specs=[pl.BlockSpec((tw, IN), lambda i: (i, 0))],
        out_specs=pl.BlockSpec((tw, IN), lambda i: (i, 0)),
        compiler_params=pltpu.CompilerParams(dimension_semantics=("parallel",)),
    )(w)


# ----------------------------------------------------------------------------
# Kernel 3: ArcFace margin logits (batch tiles x class tiles)
# ----------------------------------------------------------------------------
def _arcface_kernel(x_ref, wn_ref, lbl_ref, out_ref,
                    *, cos_m, sin_m, th, mm, s, easy_margin, tn, mxu_dtype):
    x = x_ref[...].astype(jnp.float32)                   # (TB, IN)
    inv = jax.lax.rsqrt(jnp.maximum(jnp.sum(x * x, axis=-1, keepdims=True), 1e-24))
    x_n = (x * inv).astype(mxu_dtype)                    # bf16 MXU operand

    cosine = jax.lax.dot_general(                        # (TB, TN), no .T
        x_n, wn_ref[...], dimension_numbers=(((1,), (1,)), ((), ())),
        preferred_element_type=jnp.float32)

    sine = jnp.sqrt(jnp.maximum(1.0 - cosine * cosine, 0.0))
    phi = cosine * cos_m - sine * sin_m
    if easy_margin:
        phi = jnp.where(cosine > 0, phi, cosine)
    else:
        phi = jnp.where(cosine - th > 0, phi, cosine - mm)

    lbl = lbl_ref[...]                                   # (TB, 1) int32
    cols = pl.program_id(1) * tn + jax.lax.broadcasted_iota(jnp.int32,
                                                            cosine.shape, 1)
    out_ref[...] = jnp.where(cols == lbl, phi, cosine) * s


def arcface_call(x, w_n, lbl2d, *, cos_m, sin_m, th, mm, s, easy_margin):
    B, IN = x.shape
    R = w_n.shape[0]
    tb = _pick_tile(B, 256, 8)
    tn = _pick_tile(R, 512, 128)
    if B // tb == 1 and R // tn == 1 and R >= 256:
        tn = _pick_tile(R, R // 2, 128)   # give megacore >= 2 parallel grid steps
    kernel = functools.partial(_arcface_kernel, cos_m=cos_m, sin_m=sin_m, th=th,
                               mm=mm, s=s, easy_margin=easy_margin, tn=tn,
                               mxu_dtype=w_n.dtype)
    return pl.pallas_call(
        kernel,
        out_shape=jax.ShapeDtypeStruct((B, R), jnp.float32),
        grid=(B // tb, R // tn),
        in_specs=[
            pl.BlockSpec((tb, IN), lambda i, j: (i, 0)),
            pl.BlockSpec((tn, IN), lambda i, j: (j, 0)),
            pl.BlockSpec((tb, 1), lambda i, j: (i, 0)),
        ],
        out_specs=pl.BlockSpec((tb, tn), lambda i, j: (i, j)),
        compiler_params=pltpu.CompilerParams(
            dimension_semantics=("parallel", "parallel")),
    )(x, w_n, lbl2d)


def arcface_logits(x, weight, label_new, *, cos_m, sin_m, th, mm, s, easy_margin,
                   mxu_dtype=jnp.bfloat16):
    B, IN = x.shape
    OUT = weight.shape[0]
    b_pad = _round_up(B, 8)
    out_pad = _round_up(OUT, 128)          # lane-dense logits / weight tiles

    x_p = x if b_pad == B else jnp.pad(x, ((0, b_pad - B), (0, 0)))
    w_p = weight if out_pad == OUT else jnp.pad(weight, ((0, out_pad - OUT), (0, 0)))
    lbl = jnp.full((b_pad, 1), -1, jnp.int32)
    lbl = lbl.at[:B, 0].set(jnp.asarray(label_new, jnp.int32))

    w_n = normalize_rows_call(w_p, out_dtype=mxu_dtype)   # hoisted row-normalize
    out = arcface_call(x_p, w_n, lbl, cos_m=cos_m, sin_m=sin_m, th=th, mm=mm,
                       s=s, easy_margin=easy_margin)
    return out[:B, :OUT]


# ----------------------------------------------------------------------------
# Host-side module mirroring DictArcMarginProduct_Reweight (train path)
# ----------------------------------------------------------------------------
class DictArcMarginProductReweight:
    def __init__(self, in_features=128, out_features=200, s=32.0, m=0.5,
                 label_dict=None, easy_margin=False, n_sample=4, key=None,
                 mxu_dtype=jnp.bfloat16):
        self.in_features = in_features
        self.out_features = out_features
        self.s = s
        self.m = m
        self.easy_margin = easy_margin
        self.n_sample = n_sample
        self.label_dict = dict(label_dict or {})
        self.mxu_dtype = mxu_dtype
        self.cos_m = math.cos(m)
        self.sin_m = math.sin(m)
        self.th = math.cos(math.pi - m)
        self.mm = math.sin(math.pi - m) * m
        self.need_back_label_list = []

        k1, k2, k3, k4, k5 = jax.random.split(key, 5)
        bound = math.sqrt(6.0 / (in_features + out_features))   # xavier_uniform_
        self.weight = jax.random.uniform(k1, (out_features, in_features),
                                         jnp.float32, -bound, bound)
        # weight_test kept at train-path shape (only rows < out_features touched)
        self.weight_test = jnp.zeros((out_features, in_features), jnp.float32)

        # NoiseWeighting: Linear(in*n, 512), Linear(512, n)
        d = in_features * n_sample
        b1 = 1.0 / math.sqrt(d)
        self.nw_w1 = jax.random.uniform(k2, (512, d), jnp.float32, -b1, b1)
        self.nw_b1 = jax.random.uniform(k3, (512,), jnp.float32, -b1, b1)
        b2 = 1.0 / math.sqrt(512)
        self.nw_w2 = jax.random.uniform(k4, (n_sample, 512), jnp.float32, -b2, b2)
        self.nw_b2 = jax.random.uniform(k5, (n_sample,), jnp.float32, -b2, b2)

    # --- NoiseWeighting.forward for ALL classes at once (single pallas_call) ---
    def _ensemble_feature_batched(self, x, idx_lists):
        n, d_in = self.n_sample, self.in_features
        g_counts = []
        for idx in idx_lists:
            k = len(idx)
            assert k > 0 and k % n == 0, "class sample count must be multiple of n_sample"
            g_counts.append(k // n)
        g_pad = max(8, _round_up(max(g_counts), 8))      # sublane-friendly tile
        rows = g_pad * n
        c = len(idx_lists)
        idx_mat = np.zeros((c, rows), np.int32)
        valid = np.zeros((c, rows, 1), np.float32)
        for ci, idx in enumerate(idx_lists):
            idx_mat[ci, :len(idx)] = np.asarray(idx, np.int32)
            valid[ci, :len(idx), 0] = 1.0
        xg = x[jnp.asarray(idx_mat)] * jnp.asarray(valid)       # (C, rows, in)
        x_groups = xg.reshape(c, g_pad, n * d_in)
        counts = jnp.asarray(g_counts, jnp.int32)
        return noise_weighting_batched(counts, x_groups, self.nw_w1, self.nw_b1,
                                       self.nw_w2, self.nw_b2,
                                       n_sample=n, in_features=d_in)

    def forward(self, x, label, label_set, testing=False):
        # TODO(synk): forward_test path (weight_test snapshot + two logit outputs)
        # reuses the same kernels but is not wired here; train path only.
        return self.forward_train(x, label, label_set)

    def forward_train(self, x, label, label_set):
        # restore rows borrowed by a previous step (host-side, as in torch)
        for label_id in self.need_back_label_list:
            self.weight = self.weight.at[label_id].set(self.weight_test[label_id])
            self.weight_test = self.weight_test.at[label_id].set(0.0)
        self.need_back_label_list.clear()

        label_np = np.asarray(label)
        label_new = np.full(label_np.shape, -1, dtype=np.int64)
        used_ind_set = set()
        filter_label_list = []
        jobs = []                               # (target_row, sample_indices, borrowed)

        for label_id in label_set:
            assert label_id in self.label_dict
            mapped = self.label_dict[label_id]
            assert mapped < self.out_features
            if mapped not in used_ind_set:
                mask = label_np == label_id
                label_new[mask] = mapped
                jobs.append((mapped, np.nonzero(mask)[0], False))
                used_ind_set.add(mapped)
            else:
                filter_label_list.append(label_id)

        candidate = [i for i in range(self.out_features) if i not in used_ind_set]
        sta = 0
        for label_id in filter_label_list:
            assert sta < len(candidate)
            mask = label_np == label_id
            row = candidate[sta]
            label_new[mask] = row
            jobs.append((row, np.nonzero(mask)[0], True))
            self.need_back_label_list.append(row)
            sta += 1

        if jobs:
            borrow_rows = np.asarray([r for (r, _, b) in jobs if b], np.int32)
            if borrow_rows.size:
                br = jnp.asarray(borrow_rows)
                self.weight_test = self.weight_test.at[br].set(self.weight[br])
            target_rows = jnp.asarray([r for (r, _, _) in jobs], jnp.int32)
            protos = self._ensemble_feature_batched(x, [idx for (_, idx, _) in jobs])
            self.weight = self.weight.at[target_rows].set(protos)   # one scatter

        output = arcface_logits(x, self.weight, label_new,
                                cos_m=self.cos_m, sin_m=self.sin_m, th=self.th,
                                mm=self.mm, s=self.s, easy_margin=self.easy_margin,
                                mxu_dtype=self.mxu_dtype)
        return output, label_new


# ----------------------------------------------------------------------------
# Pure-JAX references (correctness checks only)
# ----------------------------------------------------------------------------
def _ref_ensemble(x_sub, w1, b1, w2, b2, n_sample):
    g = x_sub.shape[0] // n_sample
    d = x_sub.shape[1]
    xf = x_sub.reshape(g, n_sample * d)
    h = jnp.dot(xf, w1.T, precision=jax.lax.Precision.HIGHEST) + b1
    o = jnp.dot(h, w2.T, precision=jax.lax.Precision.HIGHEST) + b2
    score = jax.nn.sigmoid(jnp.maximum(o, 0.0))
    xs = xf.reshape(g, n_sample, d)
    return (score[:, :, None] * xs).mean(axis=1).mean(axis=0)


def _ref_arcface(x, weight, label_new, cos_m, sin_m, th, mm, s,
                 easy_margin=False, mxu_dtype=jnp.bfloat16):
    x_n = x * jax.lax.rsqrt(jnp.maximum(jnp.sum(x * x, -1, keepdims=True), 1e-24))
    w_n = weight * jax.lax.rsqrt(
        jnp.maximum(jnp.sum(weight * weight, -1, keepdims=True), 1e-24))
    cosine = jax.lax.dot_general(x_n.astype(mxu_dtype), w_n.astype(mxu_dtype),
                                 dimension_numbers=(((1,), (1,)), ((), ())),
                                 preferred_element_type=jnp.float32)
    sine = jnp.sqrt(jnp.maximum(1.0 - cosine * cosine, 0.0))
    phi = cosine * cos_m - sine * sin_m
    if easy_margin:
        phi = jnp.where(cosine > 0, phi, cosine)
    else:
        phi = jnp.where(cosine - th > 0, phi, cosine - mm)
    one_hot = jax.nn.one_hot(jnp.asarray(label_new), weight.shape[0],
                             dtype=jnp.float32)
    return (one_hot * phi + (1.0 - one_hot) * cosine) * s


if __name__ == "__main__":
    key = jax.random.PRNGKey(0)
    k_mod, k_x = jax.random.split(key)

    in_features, out_features, n_sample = 128, 200, 4
    B = 8  # two classes x n_sample samples each

    label_dict = {10: 3, 20: 7}
    module = DictArcMarginProductReweight(
        in_features=in_features, out_features=out_features, s=32.0, m=0.5,
        label_dict=label_dict, easy_margin=False, n_sample=n_sample, key=k_mod)

    x = jax.random.normal(k_x, (B, in_features), jnp.float32)
    label = np.array([10, 10, 10, 10, 20, 20, 20, 20], dtype=np.int64)
    label_set = [10, 20]

    output, label_new = module.forward(x, label, label_set, testing=False)
    output = jax.block_until_ready(output)
    assert output.shape == (B, out_features)
    assert list(label_new) == [3, 3, 3, 3, 7, 7, 7, 7]

    # 1) prototype rows from the batched noise-weighting kernel
    for label_id, row in label_dict.items():
        idx = np.nonzero(label == label_id)[0]
        ref_proto = _ref_ensemble(x[idx], module.nw_w1, module.nw_b1,
                                  module.nw_w2, module.nw_b2, n_sample)
        np.testing.assert_allclose(np.asarray(module.weight[row]),
                                   np.asarray(ref_proto), rtol=2e-3, atol=2e-3)

    # 2) ArcFace logits vs a pure-JAX reference using the same bf16 MXU operands
    ref = _ref_arcface(x, module.weight, label_new, module.cos_m, module.sin_m,
                       module.th, module.mm, module.s,
                       easy_margin=False, mxu_dtype=jnp.bfloat16)
    np.testing.assert_allclose(np.asarray(output), np.asarray(ref),
                               rtol=5e-3, atol=5e-3)

    print("KERNEL_OK")
</pallas_src>

<mosaic_0001>
module attributes {stable_mosaic.version = 11 : i64} {
  func.func @_noise_weighting_kernel(%arg0: i32, %arg1: memref<2xi32, #tpu.memory_space<smem>>, %arg2: memref<1x8x512xf32, #tpu.memory_space<vmem>>, %arg3: memref<512x512xf32, #tpu.memory_space<vmem>>, %arg4: memref<1x512xf32, #tpu.memory_space<vmem>>, %arg5: memref<4x512xf32, #tpu.memory_space<vmem>>, %arg6: memref<1x4xf32, #tpu.memory_space<vmem>>, %arg7: memref<2x128xf32, #tpu.memory_space<vmem>>) attributes {dimension_semantics = [#tpu.dimension_semantics<arbitrary>], iteration_bounds = array<i64: 2>, scalar_prefetch = 1 : i64, scratch_operands = 0 : i64, tpu.core_type = #tpu.core_type<tc>, window_params = [{transform_indices = @transform_0, window_bounds = array<i64: 1, 8, 512>}, {pipeline_mode = #tpu.pipeline_mode<synchronous>, transform_indices = @transform_1, window_bounds = array<i64: 512, 512>}, {pipeline_mode = #tpu.pipeline_mode<synchronous>, transform_indices = @transform_2, window_bounds = array<i64: 1, 512>}, {pipeline_mode = #tpu.pipeline_mode<synchronous>, transform_indices = @transform_3, window_bounds = array<i64: 4, 512>}, {pipeline_mode = #tpu.pipeline_mode<synchronous>, transform_indices = @transform_4, window_bounds = array<i64: 1, 4>}, {pipeline_mode = #tpu.pipeline_mode<synchronous>, transform_indices = @transform_5, window_bounds = array<i64: 2, 128>}]} {
    %c0 = arith.constant 0 : index
    %c0_0 = arith.constant 0 : index
    %c0_1 = arith.constant 0 : index
    %0 = vector.load %arg2[%c0, %c0_0, %c0_1] : memref<1x8x512xf32, #tpu.memory_space<vmem>>, vector<1x8x512xf32>
    %1 = vector.shape_cast %0 : vector<1x8x512xf32> to vector<8x512xf32>
    %c0_2 = arith.constant 0 : index
    %c0_3 = arith.constant 0 : index
    %2 = vector.load %arg3[%c0_2, %c0_3] : memref<512x512xf32, #tpu.memory_space<vmem>>, vector<512x512xf32>
    %c0_4 = arith.constant 0 : index
    %c0_5 = arith.constant 0 : index
    %3 = vector.load %arg5[%c0_4, %c0_5] : memref<4x512xf32, #tpu.memory_space<vmem>>, vector<4x512xf32>
    %cst = arith.constant dense<0.000000e+00> : vector<8x512xf32>
    %4 = tpu.matmul %1, %2, %cst {dimension_numbers = #tpu.dot_dimension_numbers<[1], [1], [0], [0], [0, 0, 1, 0], [], []>} : vector<8x512xf32>, vector<512x512xf32>, vector<8x512xf32> -> vector<8x512xf32>
    %c0_6 = arith.constant 0 : index
    %c0_7 = arith.constant 0 : index
    %5 = vector.load %arg4[%c0_6, %c0_7] : memref<1x512xf32, #tpu.memory_space<vmem>>, vector<1x512xf32>
    %6 = vector.broadcast %5 : vector<1x512xf32> to vector<8x512xf32>
    %7 = arith.addf %4, %6 : vector<8x512xf32>
    %cst_8 = arith.constant dense<0.000000e+00> : vector<8x4xf32>
    %8 = tpu.matmul %7, %3, %cst_8 {dimension_numbers = #tpu.dot_dimension_numbers<[1], [1], [0], [0], [0, 0, 1, 0], [], []>} : vector<8x512xf32>, vector<4x512xf32>, vector<8x4xf32> -> vector<8x4xf32>
    %c0_9 = arith.constant 0 : index
    %c0_10 = arith.constant 0 : index
    %9 = vector.load %arg6[%c0_9, %c0_10] : memref<1x4xf32, #tpu.memory_space<vmem>>, vector<1x4xf32>
    %10 = vector.broadcast %9 : vector<1x4xf32> to vector<8x4xf32>
    %11 = arith.addf %8, %10 : vector<8x4xf32>
    %cst_11 = arith.constant 0.000000e+00 : f32
    %12 = vector.broadcast %cst_11 : f32 to vector<8x4xf32>
    %13 = arith.maximumf %11, %12 : vector<8x4xf32>
    %14 = arith.negf %13 : vector<8x4xf32>
    %15 = math.exp %14 : vector<8x4xf32>
    %cst_12 = arith.constant 1.000000e+00 : f32
    %16 = vector.broadcast %cst_12 : f32 to vector<8x4xf32>
    %17 = arith.addf %16, %15 : vector<8x4xf32>
    %18 = arith.divf %16, %17 : vector<8x4xf32>
    %cst_13 = arith.constant 0.000000e+00 : f32
    %19 = vector.broadcast %cst_13 : f32 to vector<8x128xf32>
    %20 = vector.extract_strided_slice %18 {offsets = [0, 0], sizes = [8, 1], strides = [1, 1]} : vector<8x4xf32> to vector<8x1xf32>
    %21 = vector.extract_strided_slice %1 {offsets = [0, 0], sizes = [8, 128], strides = [1, 1]} : vector<8x512xf32> to vector<8x128xf32>
    %22 = vector.broadcast %20 : vector<8x1xf32> to vector<8x128xf32>
    %23 = arith.mulf %22, %21 : vector<8x128xf32>
    %24 = arith.addf %19, %23 : vector<8x128xf32>
    %25 = vector.extract_strided_slice %18 {offsets = [0, 1], sizes = [8, 1], strides = [1, 1]} : vector<8x4xf32> to vector<8x1xf32>
    %26 = vector.extract_strided_slice %1 {offsets = [0, 128], sizes = [8, 128], strides = [1, 1]} : vector<8x512xf32> to vector<8x128xf32>
    %27 = vector.broadcast %25 : vector<8x1xf32> to vector<8x128xf32>
    %28 = arith.mulf %27, %26 : vector<8x128xf32>
    %29 = arith.addf %24, %28 : vector<8x128xf32>
    %30 = vector.extract_strided_slice %18 {offsets = [0, 2], sizes = [8, 1], strides = [1, 1]} : vector<8x4xf32> to vector<8x1xf32>
    %31 = vector.extract_strided_slice %1 {offsets = [0, 256], sizes = [8, 128], strides = [1, 1]} : vector<8x512xf32> to vector<8x128xf32>
    %32 = vector.broadcast %30 : vector<8x1xf32> to vector<8x128xf32>
    %33 = arith.mulf %32, %31 : vector<8x128xf32>
    %34 = arith.addf %29, %33 : vector<8x128xf32>
    %35 = vector.extract_strided_slice %18 {offsets = [0, 3], sizes = [8, 1], strides = [1, 1]} : vector<8x4xf32> to vector<8x1xf32>
    %36 = vector.extract_strided_slice %1 {offsets = [0, 384], sizes = [8, 128], strides = [1, 1]} : vector<8x512xf32> to vector<8x128xf32>
    %37 = vector.broadcast %35 : vector<8x1xf32> to vector<8x128xf32>
    %38 = arith.mulf %37, %36 : vector<8x128xf32>
    %39 = arith.addf %34, %38 : vector<8x128xf32>
    %40 = arith.index_cast %arg0 : i32 to index
    %41 = memref.load %arg1[%40] : memref<2xi32, #tpu.memory_space<smem>>
    %42 = arith.sitofp %41 : i32 to f32
    %cst_14 = arith.constant 4.000000e+00 : f32
    %43 = arith.mulf %cst_14, %42 : f32
    %cst_15 = arith.constant dense<0.000000e+00> : vector<128xf32>
    %44 = vector.multi_reduction <add>, %39, %cst_15 [0] : vector<8x128xf32> to vector<128xf32>
    %45 = vector.shape_cast %44 : vector<128xf32> to vector<1x128xf32>
    %46 = vector.broadcast %43 : f32 to vector<1x128xf32>
    %47 = arith.divf %45, %46 : vector<1x128xf32>
    %48 = tpu.iota {dimensions = array<i32: 0>} : vector<2x128xi32>
    %c0_i32 = arith.constant 0 : i32
    %49 = arith.cmpi eq, %arg0, %c0_i32 : i32
    %50 = arith.extui %49 : i1 to i32
    %c0_i32_16 = arith.constant 0 : i32
    %51 = arith.cmpi ne, %50, %c0_i32_16 : i32
    scf.if %51 {
      %cst_21 = arith.constant 0.000000e+00 : f32
      %59 = vector.broadcast %cst_21 : f32 to vector<2x128xf32>
      %c0_22 = arith.constant 0 : index
      %c0_23 = arith.constant 0 : index
      %60 = vector.load %arg7[%c0_22, %c0_23] : memref<2x128xf32, #tpu.memory_space<vmem>>, vector<2x128xf32>
      tpu.vector_store %arg7[%c0_22, %c0_23], %59 {strides = array<i32>} : memref<2x128xf32, #tpu.memory_space<vmem>>, vector<2x128xf32>,
    } else {
    }
    %52 = vector.broadcast %arg0 : i32 to vector<2x128xi32>
    %53 = arith.cmpi eq, %48, %52 : vector<2x128xi32>
    %c0_17 = arith.constant 0 : index
    %c0_18 = arith.constant 0 : index
    %54 = vector.load %arg7[%c0_17, %c0_18] : memref<2x128xf32, #tpu.memory_space<vmem>>, vector<2x128xf32>
    %55 = vector.shape_cast %47 : vector<1x128xf32> to vector<1x128xf32>
    %56 = vector.broadcast %55 : vector<1x128xf32> to vector<2x128xf32>
    %57 = arith.select %53, %56, %54 : vector<2x128xi1>, vector<2x128xf32>
    %c0_19 = arith.constant 0 : index
    %c0_20 = arith.constant 0 : index
    %58 = vector.load %arg7[%c0_19, %c0_20] : memref<2x128xf32, #tpu.memory_space<vmem>>, vector<2x128xf32>
    tpu.vector_store %arg7[%c0_19, %c0_20], %57 {strides = array<i32>} : memref<2x128xf32, #tpu.memory_space<vmem>>, vector<2x128xf32>,
    return
  }
  func.func @transform_0(%arg0: i32, %arg1: memref<2xi32, #tpu.memory_space<smem>>) -> (i32, i32, i32) {
    %c0_i32 = arith.constant 0 : i32
    %c0_i32_0 = arith.constant 0 : i32
    %c0_i32_1 = arith.constant 0 : i32
    return %arg0, %c0_i32, %c0_i32_0 : i32, i32, i32
  }
  func.func @transform_1(%arg0: i32, %arg1: memref<2xi32, #tpu.memory_space<smem>>) -> (i32, i32) {
    %c0_i32 = arith.constant 0 : i32
    %c0_i32_0 = arith.constant 0 : i32
    %c0_i32_1 = arith.constant 0 : i32
    return %c0_i32, %c0_i32_0 : i32, i32
  }
  func.func @transform_2(%arg0: i32, %arg1: memref<2xi32, #tpu.memory_space<smem>>) -> (i32, i32) {
    %c0_i32 = arith.constant 0 : i32
    %c0_i32_0 = arith.constant 0 : i32
    %c0_i32_1 = arith.constant 0 : i32
    return %c0_i32, %c0_i32_0 : i32, i32
  }
  func.func @transform_3(%arg0: i32, %arg1: memref<2xi32, #tpu.memory_space<smem>>) -> (i32, i32) {
    %c0_i32 = arith.constant 0 : i32
    %c0_i32_0 = arith.constant 0 : i32
    %c0_i32_1 = arith.constant 0 : i32
    return %c0_i32, %c0_i32_0 : i32, i32
  }
  func.func @transform_4(%arg0: i32, %arg1: memref<2xi32, #tpu.memory_space<smem>>) -> (i32, i32) {
    %c0_i32 = arith.constant 0 : i32
    %c0_i32_0 = arith.constant 0 : i32
    %c0_i32_1 = arith.constant 0 : i32
    return %c0_i32, %c0_i32_0 : i32, i32
  }
  func.func @transform_5(%arg0: i32, %arg1: memref<2xi32, #tpu.memory_space<smem>>) -> (i32, i32) {
    %c0_i32 = arith.constant 0 : i32
    %c0_i32_0 = arith.constant 0 : i32
    %c0_i32_1 = arith.constant 0 : i32
    return %c0_i32, %c0_i32_0 : i32, i32
  }
}

</mosaic_0001>

<llo_original>
// kernel: tpu_custom_call.1
$region0: #{tpu_custom_call.1}
  #allocation0 [shape = 'u32[]', space=smem, size = 0x4, offset = 0x4, fixed_abs, tag = 'smem constant byte address 0x4 - core index']
  #allocation1 [shape = 'u32[144,128]{1,0:T(1,128)}', space=vmem, size = 0x12000, scoped, tag = 'internal scratch']
  #allocation2 [shape = 's32[1]{0}', space=sflag, size = 0x4, scoped, tag = 'scoped memory for tpu_custom_call.1']
  #allocation3 [shape = 'u8[512]{0}', space=smem, size = 0x200, scoped, tag = 'prefetched SMEM operand 0']
  %s0 = inlined_call_operand.hbm [shape: s32[2], index: 0, kind: input, shape index: {}]
  %s1 = inlined_call_operand.hbm [shape: f32[2,8,512], index: 1, kind: input, shape index: {}]
  %s2 = inlined_call_operand.hbm [shape: f32[512,512], index: 2, kind: input, shape index: {}]
  %s3 = inlined_call_operand.vmem [shape: f32[1,512], index: 3, kind: input, shape index: {}]
  %s4 = inlined_call_operand.hbm [shape: f32[4,512], index: 4, kind: input, shape index: {}]
  %s5 = inlined_call_operand.vmem [shape: f32[1,4], index: 5, kind: input, shape index: {}]
  %s6 = inlined_call_operand.hbm [shape: f32[2,128], index: 6, kind: output, shape index: {}]
  %s7 = sld [smem:[#allocation0]]
  $region69: #{tpu_custom_call.1} parent=0
    _
  %s9 = ssub.s32 1, %s7
  %s10 = scalar_select 0, %s9, %s7
  %12 = dma.hbm_to_smem %s0, 16, [#allocation3], [#allocation2]
  %13 = dma.done [#allocation2], 16
  %14 = sfence
  $region1: #{tpu_custom_call.1} parent=0
    #allocation4 [shape = 'u8[32768]{0}', space=vmem, size = 0x8000, scoped, tag = 'input window, operand 1']
    #allocation5 [shape = 's32[2]{0}', space=sflag, size = 0x8, scoped, tag = 'scoped memory for tpu_custom_call.1']
    #allocation6 [shape = 's32[2]{0}', space=sflag, size = 0x8, scoped, tag = 'scoped memory for tpu_custom_call.1']
    #allocation7 [shape = 'u8[1048576]{0}', space=vmem, size = 0x100000, scoped, tag = 'input window, operand 2, single buffered']
    #allocation8 [shape = 's32[1]{0}', space=sflag, size = 0x4, scoped, tag = 'scoped memory for tpu_custom_call.1']
    #allocation9 [shape = 'u8[8192]{0}', space=vmem, size = 0x2000, scoped, tag = 'input window, operand 4, single buffered']
    #allocation10 [shape = 'u8[1024]{0}', space=vmem, size = 0x400, scoped, tag = 'output window, operand 0, single buffered']
    %15 = vsyncpa [#allocation5], 0
    %s16 = scalar_lea.sflag [#allocation5], 1
    %17 = vsyncpa %s16, 0
    %18 = vsyncpa [#allocation8], 0
    %19 = vsyncpa [#allocation6], 0
    loop: start=0, step=1, limit=4
    $region2: #{tpu_custom_call.1} parent=1 // loop_pre_header
      _
    $region3: #{tpu_custom_call.1} parent=1 // loop_header
      %s21 = sphi 0, %s25
      %p22 = scmp.ge.s32.totalorder %s21, 4
      %s31 = sphi 0, %s33
      %s34 = sphi 0, %s31
      %s35 = sphi 0, %s34
      %s51 = sphi 0, %s35
      %s55 = sphi 0, %s55
      %s57 = sphi 0, %s55
      %s58 = sphi 0, %s57
      %s72 = sphi 0, %s58
      %s76 = sphi 0, %s76
      %s78 = sphi 0, %s76
      %s79 = sphi 0, %s78
      %s93 = sphi 0, %s79
      %s97 = sphi 0, %s97
      %s99 = sphi 0, %s97
      %s100 = sphi 0, %s99
      %s114 = sphi 0, %s100
      %s118 = sphi 0, %s118
      %s120 = sphi 0, %s118
      %s121 = sphi 0, %s120
      %s135 = sphi 0, %s121
      %s139 = sphi 0, %s139
      %s141 = sphi 0, %s139
      %s142 = sphi 0, %s141
      %s156 = sphi 0, %s142
    $region4: #{tpu_custom_call.1} parent=1 // loop_header_branch
      %24 = sbr.rel (%p22) target = $region8
    $region5: #{tpu_custom_call.1} parent=1 // loop_body
      %s26 = ssub.s32 %s21, 1
      %s27 = ssub.s32 %s21, 2
      %s28 = sadd.s32 %s21, 1
      %s29 = ssub.s32 %s21, %s28
      %p30 = scmp.eq.s32.totalorder %s29, 0
      %s32 = sadd.s32 %s31, 1
      %s33 = scalar_select %p30, %s31, %s32
      %p36 = pneg %p30
      %p37 = scmp.eq.s32.totalorder %s21, 1
      %p38 = por %p36, %p37
      %p39 = scmp.ne.s32.totalorder %s31, %s34
      %p40 = scmp.eq.s32.totalorder %s21, 0
      %p41 = por %p39, %p40
      %p42 = scmp.ne.s32.totalorder %s31, %s34
      %p43 = scmp.eq.s32.totalorder %s26, 1
      %p44 = por %p42, %p43
      %p45 = scmp.ne.s32.totalorder %s34, %s35
      %p46 = scmp.eq.s32.totalorder %s26, 0
      %p47 = por %p45, %p46
      %p48 = scmp.ne.s32.totalorder %s34, %s35
      %p49 = scmp.eq.s32.totalorder %s27, 1
      %p50 = por %p48, %p49
      %p52 = scmp.ne.s32.totalorder %s35, %s51
      %p53 = scmp.eq.s32.totalorder %s27, 0
      %p54 = por %p52, %p53
      %s56 = sadd.s32 %s55, 1
      %p59 = scmp.eq.s32.totalorder %s21, 1
      %p60 = scmp.ne.s32.totalorder %s55, %s57
      %p61 = scmp.eq.s32.totalorder %s21, 0
      %p62 = por %p60, %p61
      %p63 = scmp.ne.s32.totalorder %s55, %s57
      %p64 = scmp.eq.s32.totalorder %s26, 1
      %p65 = por %p63, %p64
      %p66 = scmp.ne.s32.totalorder %s57, %s58
      %p67 = scmp.eq.s32.totalorder %s26, 0
      %p68 = por %p66, %p67
      %p69 = scmp.ne.s32.totalorder %s57, %s58
      %p70 = scmp.eq.s32.totalorder %s27, 1
      %p71 = por %p69, %p70
      %p73 = scmp.ne.s32.totalorder %s58, %s72
      %p74 = scmp.eq.s32.totalorder %s27, 0
      %p75 = por %p73, %p74
      %s77 = sadd.s32 %s76, 1
      %p80 = scmp.eq.s32.totalorder %s21, 1
      %p81 = scmp.ne.s32.totalorder %s76, %s78
      %p82 = scmp.eq.s32.totalorder %s21, 0
      %p83 = por %p81, %p82
      %p84 = scmp.ne.s32.totalorder %s76, %s78
      %p85 = scmp.eq.s32.totalorder %s26, 1
      %p86 = por %p84, %p85
      %p87 = scmp.ne.s32.totalorder %s78, %s79
      %p88 = scmp.eq.s32.totalorder %s26, 0
      %p89 = por %p87, %p88
      %p90 = scmp.ne.s32.totalorder %s78, %s79
      %p91 = scmp.eq.s32.totalorder %s27, 1
      %p92 = por %p90, %p91
      %p94 = scmp.ne.s32.totalorder %s79, %s93
      %p95 = scmp.eq.s32.totalorder %s27, 0
      %p96 = por %p94, %p95
      %s98 = sadd.s32 %s97, 1
      %p101 = scmp.eq.s32.totalorder %s21, 1
      %p102 = scmp.ne.s32.totalorder %s97, %s99
      %p103 = scmp.eq.s32.totalorder %s21, 0
      %p104 = por %p102, %p103
      %p105 = scmp.ne.s32.totalorder %s97, %s99
      %p106 = scmp.eq.s32.totalorder %s26, 1
      %p107 = por %p105, %p106
      %p108 = scmp.ne.s32.totalorder %s99, %s100
      %p109 = scmp.eq.s32.totalorder %s26, 0
      %p110 = por %p108, %p109
      %p111 = scmp.ne.s32.totalorder %s99, %s100
      %p112 = scmp.eq.s32.totalorder %s27, 1
      %p113 = por %p111, %p112
      %p115 = scmp.ne.s32.totalorder %s100, %s114
      %p116 = scmp.eq.s32.totalorder %s27, 0
      %p117 = por %p115, %p116
      %s119 = sadd.s32 %s118, 1
      %p122 = scmp.eq.s32.totalorder %s21, 1
      %p123 = scmp.ne.s32.totalorder %s118, %s120
      %p124 = scmp.eq.s32.totalorder %s21, 0
      %p125 = por %p123, %p124
      %p126 = scmp.ne.s32.totalorder %s118, %s120
      %p127 = scmp.eq.s32.totalorder %s26, 1
      %p128 = por %p126, %p127
      %p129 = scmp.ne.s32.totalorder %s120, %s121
      %p130 = scmp.eq.s32.totalorder %s26, 0
      %p131 = por %p129, %p130
      %p132 = scmp.ne.s32.totalorder %s120, %s121
      %p133 = scmp.eq.s32.totalorder %s27, 1
      %p134 = por %p132, %p133
      %p136 = scmp.ne.s32.totalorder %s121, %s135
      %p137 = scmp.eq.s32.totalorder %s27, 0
      %p138 = por %p136, %p137
      %s140 = sadd.s32 %s139, 1
      %p143 = scmp.eq.s32.totalorder %s21, 1
      %p144 = scmp.ne.s32.totalorder %s139, %s141
      %p145 = scmp.eq.s32.totalorder %s21, 0
      %p146 = por %p144, %p145
      %p147 = scmp.ne.s32.totalorder %s139, %s141
      %p148 = scmp.eq.s32.totalorder %s26, 1
      %p149 = por %p147, %p148
      %p150 = scmp.ne.s32.totalorder %s141, %s142
      %p151 = scmp.eq.s32.totalorder %s26, 0
      %p152 = por %p150, %p151
      %p153 = scmp.ne.s32.totalorder %s141, %s142
      %p154 = scmp.eq.s32.totalorder %s27, 1
      %p155 = por %p153, %p154
      %p157 = scmp.ne.s32.totalorder %s142, %s156
      %p158 = scmp.eq.s32.totalorder %s27, 0
      %p159 = por %p157, %p158
      %p160 = scmp.le.s32.totalorder 1, %s21
      %p161 = scmp.lt.s32.totalorder %s21, 3
      %p162 = pnand %p160, %p161
      %p163 = pneg %p162
      // Predicated region
      $region9: #{tpu_custom_call.1} parent=5 // pred_check
        _
      $region10: #{tpu_custom_call.1} parent=5 // pred_check_branch
        %165 = sbr.rel (%p162) target = $region12
      $region11: #{tpu_custom_call.1} parent=5 // pred_region
        %s166 = ssub.s32 %s21, 1
        // Predicated region
        $region13: #{tpu_custom_call.1} parent=11 // pred_check
          %p167 = pneg %p68
        $region14: #{tpu_custom_call.1} parent=11 // pred_check_branch
          %169 = sbr.rel (%p167) target = $region16
        $region15: #{tpu_custom_call.1} parent=11 // pred_region
          %s171 = ssub.s32 32768, 32768
          %172 = vsyncadd [#allocation8], %s171
          %s173 = sshll.u32 [#allocation7], 4
          %s174 = int_to_ptr.vmem [resolvable:$true] %s173
          %179 = dma.hbm_to_vmem [thread:$0]  %s2, 32768, %s174, [#allocation8], 512, 512, 32
        $region16: #{tpu_custom_call.1} parent=11 // pred_fallthru
          _
        // Predicated region
        $region17: #{tpu_custom_call.1} parent=11 // pred_check
          %p180 = pneg %p89
        $region18: #{tpu_custom_call.1} parent=11 // pred_check_branch
          %182 = sbr.rel (%p180) target = $region20
        $region19: #{tpu_custom_call.1} parent=11 // pred_region
          _
        $region20: #{tpu_custom_call.1} parent=11 // pred_fallthru
          _
        // Predicated region
        $region21: #{tpu_custom_call.1} parent=11 // pred_check
          %p183 = pneg %p110
        $region22: #{tpu_custom_call.1} parent=11 // pred_check_branch
          %185 = sbr.rel (%p183) target = $region24
        $region23: #{tpu_custom_call.1} parent=11 // pred_region
          %s187 = ssub.s32 256, 256
          %188 = vsyncadd [#allocation8], %s187
          %s190 = sshll.u32 [#allocation9], 4
          %s191 = int_to_ptr.vmem [resolvable:$true] %s190
          %193 = dma.hbm_to_vmem [thread:$0]  %s4, 256, %s191, [#allocation8]
        $region24: #{tpu_custom_call.1} parent=11 // pred_fallthru
          _
        // Predicated region
        $region25: #{tpu_custom_call.1} parent=11 // pred_check
          %p194 = pneg %p131
        $region26: #{tpu_custom_call.1} parent=11 // pred_check_branch
          %196 = sbr.rel (%p194) target = $region28
        $region27: #{tpu_custom_call.1} parent=11 // pred_region
          _
        $region28: #{tpu_custom_call.1} parent=11 // pred_fallthru
          _
      $region12: #{tpu_custom_call.1} parent=5 // pred_fallthru
        _
      %p197 = scmp.lt.s32.totalorder %s21, 2
      // Predicated region
      $region29: #{tpu_custom_call.1} parent=5 // pred_check
        %p198 = pneg %p197
      $region30: #{tpu_custom_call.1} parent=5 // pred_check_branch
        %200 = sbr.rel (%p198) target = $region32
      $region31: #{tpu_custom_call.1} parent=5 // pred_region
        // Predicated region
        $region33: #{tpu_custom_call.1} parent=31 // pred_check
          %p201 = pneg %p41
        $region34: #{tpu_custom_call.1} parent=31 // pred_check_branch
          %203 = sbr.rel (%p201) target = $region36
        $region35: #{tpu_custom_call.1} parent=31 // pred_region
          %s204 = sand.u32 %s31, 1
          %s205 = scalar_lea.sflag [#allocation5], %s204
          %s206 = sand.u32 %s31, 1
          %s207 = smul.addr %s206, 32
          %s208 = scalar_lea.vmem [#allocation4], %s207
          %s210 = ssub.s32 512, 512
          %211 = vsyncadd %s205, %s210
          %s212 = smul.addr %s21, 4
          %s213 = smul.addr %s212, 128
          %s214 = scalar_lea.hbm %s1, %s213
          %s216 = sshll.u32 %s208, 4
          %s217 = int_to_ptr.vmem [resolvable:$true] %s216
          %219 = dma.hbm_to_vmem [thread:$0]  %s214, 512, %s217, %s205
        $region36: #{tpu_custom_call.1} parent=31 // pred_fallthru
          _
      $region32: #{tpu_custom_call.1} parent=5 // pred_fallthru
        _
      %p220 = scmp.le.s32.totalorder 1, %s21
      %p221 = scmp.lt.s32.totalorder %s21, 3
      %p222 = pnand %p220, %p221
      %p223 = pneg %p222
      // Predicated region
      $region37: #{tpu_custom_call.1} parent=5 // pred_check
        _
      $region38: #{tpu_custom_call.1} parent=5 // pred_check_branch
        %225 = sbr.rel (%p222) target = $region40
      $region39: #{tpu_custom_call.1} parent=5 // pred_region
        %s226 = ssub.s32 %s21, 1
        %s227 = sand.u32 %s34, 1
        %s228 = scalar_lea.sflag [#allocation5], %s227
        %s229 = sand.u32 %s34, 1
        %s230 = smul.addr %s229, 32
        %s231 = scalar_lea.vmem [#allocation4], %s230
        // Predicated region
        $region41: #{tpu_custom_call.1} parent=39 // pred_check
          %p232 = pneg %p47
        $region42: #{tpu_custom_call.1} parent=39 // pred_check_branch
          %234 = sbr.rel (%p232) target = $region44
        $region43: #{tpu_custom_call.1} parent=39 // pred_region
          %235 = dma.done %s228, 512
        $region44: #{tpu_custom_call.1} parent=39 // pred_fallthru
          _
        // Predicated region
        $region45: #{tpu_custom_call.1} parent=39 // pred_check
          %p236 = pneg %p68
        $region46: #{tpu_custom_call.1} parent=39 // pred_check_branch
          %238 = sbr.rel (%p236) target = $region48
        $region47: #{tpu_custom_call.1} parent=39 // pred_region
          %239 = dma.done [#allocation8], 32768
        $region48: #{tpu_custom_call.1} parent=39 // pred_fallthru
          _
        // Predicated region
        $region49: #{tpu_custom_call.1} parent=39 // pred_check
          %p240 = pneg %p110
        $region50: #{tpu_custom_call.1} parent=39 // pred_check_branch
          %242 = sbr.rel (%p240) target = $region52
        $region51: #{tpu_custom_call.1} parent=39 // pred_region
          %243 = dma.done [#allocation8], 256
        $region52: #{tpu_custom_call.1} parent=39 // pred_fallthru
          _
        %s244 = sand.u32 %s34, 1
        %s245 = scalar_lea.sflag [#allocation5], %s244
        %s246 = sand.u32 %s34, 1
        %s247 = smul.addr %s246, 32
        %s248 = scalar_lea.vmem [#allocation4], %s247
        %p249 = pneg %p47
        %p250 = pneg %p44
        %p251 = pneg %p68
        %p252 = pneg %p65
        %p253 = pneg %p89
        %p254 = pneg %p86
        %p255 = pneg %p110
        %p256 = pneg %p107
        %p257 = pneg %p131
        %p258 = pneg %p128
        %p259 = pneg %p152
        %p260 = pneg %p149
        %v261 = vld [vmem:[%s231] sm:$0xff]
        %v262 = vld [vmem:[%s231 + $0x8] sm:$0xff]
        %v263 = vld [vmem:[%s231 + $0x10] sm:$0xff]
        %v264 = vld [vmem:[%s231 + $0x18] sm:$0xff]
        %v265 = vld [vmem:[#allocation7] sm:$0xff]
        %v266 = vld [vmem:[#allocation7 + $0x8] sm:$0xff]
        %v267 = vld [vmem:[#allocation7 + $0x10] sm:$0xff]
        %v268 = vld [vmem:[#allocation7 + $0x18] sm:$0xff]
        %v269 = vld [vmem:[#allocation7 + $0x20] sm:$0xff]
        %v270 = vld [vmem:[#allocation7 + $0x28] sm:$0xff]
        %v271 = vld [vmem:[#allocation7 + $0x30] sm:$0xff]
        %v272 = vld [vmem:[#allocation7 + $0x38] sm:$0xff]
        %v273 = vld [vmem:[#allocation7 + $0x40] sm:$0xff]
        %v274 = vld [vmem:[#allocation7 + $0x48] sm:$0xff]
        %v275 = vld [vmem:[#allocation7 + $0x50] sm:$0xff]
        %v276 = vld [vmem:[#allocation7 + $0x58] sm:$0xff]
        %v277 = vld [vmem:[#allocation7 + $0x60] sm:$0xff]
        %v278 = vld [vmem:[#allocation7 + $0x68] sm:$0xff]
        %v279 = vld [vmem:[#allocation7 + $0x70] sm:$0xff]
        %v280 = vld [vmem:[#allocation7 + $0x78] sm:$0xff]
        %v281 = vld [vmem:[#allocation7 + $0x80] sm:$0xff]
        %v282 = vld [vmem:[#allocation7 + $0x88] sm:$0xff]
        %v283 = vld [vmem:[#allocation7 + $0x90] sm:$0xff]
        %v284 = vld [vmem:[#allocation7 + $0x98] sm:$0xff]
        %v285 = vld [vmem:[#allocation7 + $0xa0] sm:$0xff]
        %v286 = vld [vmem:[#allocation7 + $0xa8] sm:$0xff]
        %v287 = vld [vmem:[#allocation7 + $0xb0] sm:$0xff]
        %v288 = vld [vmem:[#allocation7 + $0xb8] sm:$0xff]
        %v289 = vld [vmem:[#allocation7 + $0xc0] sm:$0xff]
        %v290 = vld [vmem:[#allocation7 + $0xc8] sm:$0xff]
        %v291 = vld [vmem:[#allocation7 + $0xd0] sm:$0xff]
        %v292 = vld [vmem:[#allocation7 + $0xd8] sm:$0xff]
        %v293 = vld [vmem:[#allocation7 + $0xe0] sm:$0xff]
        %v294 = vld [vmem:[#allocation7 + $0xe8] sm:$0xff]
        %v295 = vld [vmem:[#allocation7 + $0xf0] sm:$0xff]
        %v296 = vld [vmem:[#allocation7 + $0xf8] sm:$0xff]
        %v297 = vld [vmem:[#allocation7 + $0x100] sm:$0xff]
        %v298 = vld [vmem:[#allocation7 + $0x108] sm:$0xff]
        %v299 = vld [vmem:[#allocation7 + $0x110] sm:$0xff]
        %v300 = vld [vmem:[#allocation7 + $0x118] sm:$0xff]
        %v301 = vld [vmem:[#allocation7 + $0x120] sm:$0xff]
        %v302 = vld [vmem:[#allocation7 + $0x128] sm:$0xff]
        %v303 = vld [vmem:[#allocation7 + $0x130] sm:$0xff]
        %v304 = vld [vmem:[#allocation7 + $0x138] sm:$0xff]
        %v305 = vld [vmem:[#allocation7 + $0x140] sm:$0xff]
        %v306 = vld [vmem:[#allocation7 + $0x148] sm:$0xff]
        %v307 = vld [vmem:[#allocation7 + $0x150] sm:$0xff]
        %v308 = vld [vmem:[#allocation7 + $0x158] sm:$0xff]
        %v309 = vld [vmem:[#allocation7 + $0x160] sm:$0xff]
        %v310 = vld [vmem:[#allocation7 + $0x168] sm:$0xff]
        %v311 = vld [vmem:[#allocation7 + $0x170] sm:$0xff]
        %v312 = vld [vmem:[#allocation7 + $0x178] sm:$0xff]
        %v313 = vld [vmem:[#allocation7 + $0x180] sm:$0xff]
        %v314 = vld [vmem:[#allocation7 + $0x188] sm:$0xff]
        %v315 = vld [vmem:[#allocation7 + $0x190] sm:$0xff]
        %v316 = vld [vmem:[#allocation7 + $0x198] sm:$0xff]
        %v317 = vld [vmem:[#allocation7 + $0x1a0] sm:$0xff]
        %v318 = vld [vmem:[#allocation7 + $0x1a8] sm:$0xff]
        %v319 = vld [vmem:[#allocation7 + $0x1b0] sm:$0xff]
        %v320 = vld [vmem:[#allocation7 + $0x1b8] sm:$0xff]
        %v321 = vld [vmem:[#allocation7 + $0x1c0] sm:$0xff]
        %v322 = vld [vmem:[#allocation7 + $0x1c8] sm:$0xff]
        %v323 = vld [vmem:[#allocation7 + $0x1d0] sm:$0xff]
        %v324 = vld [vmem:[#allocation7 + $0x1d8] sm:$0xff]
        %v325 = vld [vmem:[#allocation7 + $0x1e0] sm:$0xff]
        %v326 = vld [vmem:[#allocation7 + $0x1e8] sm:$0xff]
        %v327 = vld [vmem:[#allocation7 + $0x1f0] sm:$0xff]
        %v328 = vld [vmem:[#allocation7 + $0x1f8] sm:$0xff]
        %v329 = vld [vmem:[#allocation7 + $0x200] sm:$0xff]
        %v330 = vld [vmem:[#allocation7 + $0x208] sm:$0xff]
        %v331 = vld [vmem:[#allocation7 + $0x210] sm:$0xff]
        %v332 = vld [vmem:[#allocation7 + $0x218] sm:$0xff]
        %v333 = vld [vmem:[#allocation7 + $0x220] sm:$0xff]
        %v334 = vld [vmem:[#allocation7 + $0x228] sm:$0xff]
        %v335 = vld [vmem:[#allocation7 + $0x230] sm:$0xff]
        %v336 = vld [vmem:[#allocation7 + $0x238] sm:$0xff]
        %v337 = vld [vmem:[#allocation7 + $0x240] sm:$0xff]
        %v338 = vld [vmem:[#allocation7 + $0x248] sm:$0xff]
        %v339 = vld [vmem:[#allocation7 + $0x250] sm:$0xff]
        %v340 = vld [vmem:[#allocation7 + $0x258] sm:$0xff]
        %v341 = vld [vmem:[#allocation7 + $0x260] sm:$0xff]
        %v342 = vld [vmem:[#allocation7 + $0x268] sm:$0xff]
        %v343 = vld [vmem:[#allocation7 + $0x270] sm:$0xff]
        %v344 = vld [vmem:[#allocation7 + $0x278] sm:$0xff]
        %v345 = vld [vmem:[#allocation7 + $0x280] sm:$0xff]
        %v346 = vld [vmem:[#allocation7 + $0x288] sm:$0xff]
        %v347 = vld [vmem:[#allocation7 + $0x290] sm:$0xff]
        %v348 = vld [vmem:[#allocation7 + $0x298] sm:$0xff]
        %v349 = vld [vmem:[#allocation7 + $0x2a0] sm:$0xff]
        %v350 = vld [vmem:[#allocation7 + $0x2a8] sm:$0xff]
        %v351 = vld [vmem:[#allocation7 + $0x2b0] sm:$0xff]
        %v352 = vld [vmem:[#allocation7 + $0x2b8] sm:$0xff]
        %v353 = vld [vmem:[#allocation7 + $0x2c0] sm:$0xff]
        %v354 = vld [vmem:[#allocation7 + $0x2c8] sm:$0xff]
        %v355 = vld [vmem:[#allocation7 + $0x2d0] sm:$0xff]
        %v356 = vld [vmem:[#allocation7 + $0x2d8] sm:$0xff]
        %v357 = vld [vmem:[#allocation7 + $0x2e0] sm:$0xff]
        %v358 = vld [vmem:[#allocation7 + $0x2e8] sm:$0xff]
        %v359 = vld [vmem:[#allocation7 + $0x2f0] sm:$0xff]
        %v360 = vld [vmem:[#allocation7 + $0x2f8] sm:$0xff]
        %v361 = vld [vmem:[#allocation7 + $0x300] sm:$0xff]
        %v362 = vld [vmem:[#allocation7 + $0x308] sm:$0xff]
        %v363 = vld [vmem:[#allocation7 + $0x310] sm:$0xff]
        %v364 = vld [vmem:[#allocation7 + $0x318] sm:$0xff]
        %v365 = vld [vmem:[#allocation7 + $0x320] sm:$0xff]
        %v366 = vld [vmem:[#allocation7 + $0x328] sm:$0xff]
        %v367 = vld [vmem:[#allocation7 + $0x330] sm:$0xff]
        %v368 = vld [vmem:[#allocation7 + $0x338] sm:$0xff]
        %v369 = vld [vmem:[#allocation7 + $0x340] sm:$0xff]
        %v370 = vld [vmem:[#allocation7 + $0x348] sm:$0xff]
        %v371 = vld [vmem:[#allocation7 + $0x350] sm:$0xff]
        %v372 = vld [vmem:[#allocation7 + $0x358] sm:$0xff]
        %v373 = vld [vmem:[#allocation7 + $0x360] sm:$0xff]
        %v374 = vld [vmem:[#allocation7 + $0x368] sm:$0xff]
        %v375 = vld [vmem:[#allocation7 + $0x370] sm:$0xff]
        %v376 = vld [vmem:[#allocation7 + $0x378] sm:$0xff]
        %v377 = vld [vmem:[#allocation7 + $0x380] sm:$0xff]
        %v378 = vld [vmem:[#allocation7 + $0x388] sm:$0xff]
        %v379 = vld [vmem:[#allocation7 + $0x390] sm:$0xff]
        %v380 = vld [vmem:[#allocation7 + $0x398] sm:$0xff]
        %v381 = vld [vmem:[#allocation7 + $0x3a0] sm:$0xff]
        %v382 = vld [vmem:[#allocation7 + $0x3a8] sm:$0xff]
        %v383 = vld [vmem:[#allocation7 + $0x3b0] sm:$0xff]
        %v384 = vld [vmem:[#allocation7 + $0x3b8] sm:$0xff]
        %v385 = vld [vmem:[#allocation7 + $0x3c0] sm:$0xff]
        %v386 = vld [vmem:[#allocation7 + $0x3c8] sm:$0xff]
        %v387 = vld [vmem:[#allocation7 + $0x3d0] sm:$0xff]
        %v388 = vld [vmem:[#allocation7 + $0x3d8] sm:$0xff]
        %v389 = vld [vmem:[#allocation7 + $0x3e0] sm:$0xff]
        %v390 = vld [vmem:[#allocation7 + $0x3e8] sm:$0xff]
        %v391 = vld [vmem:[#allocation7 + $0x3f0] sm:$0xff]
        %v392 = vld [vmem:[#allocation7 + $0x3f8] sm:$0xff]
        %v393 = vld [vmem:[#allocation7 + $0x400] sm:$0xff]
        %v394 = vld [vmem:[#allocation7 + $0x408] sm:$0xff]
        %v395 = vld [vmem:[#allocation7 + $0x410] sm:$0xff]
        %v396 = vld [vmem:[#allocation7 + $0x418] sm:$0xff]
        %v397 = vld [vmem:[#allocation7 + $0x420] sm:$0xff]
        %v398 = vld [vmem:[#allocation7 + $0x428] sm:$0xff]
        %v399 = vld [vmem:[#allocation7 + $0x430] sm:$0xff]
        %v400 = vld [vmem:[#allocation7 + $0x438] sm:$0xff]
        %v401 = vld [vmem:[#allocation7 + $0x440] sm:$0xff]
        %v402 = vld [vmem:[#allocation7 + $0x448] sm:$0xff]
        %v403 = vld [vmem:[#allocation7 + $0x450] sm:$0xff]
        %v404 = vld [vmem:[#allocation7 + $0x458] sm:$0xff]
        %v405 = vld [vmem:[#allocation7 + $0x460] sm:$0xff]
        %v406 = vld [vmem:[#allocation7 + $0x468] sm:$0xff]
        %v407 = vld [vmem:[#allocation7 + $0x470] sm:$0xff]
        %v408 = vld [vmem:[#allocation7 + $0x478] sm:$0xff]
        %v409 = vld [vmem:[#allocation7 + $0x480] sm:$0xff]
        %v410 = vld [vmem:[#allocation7 + $0x488] sm:$0xff]
        %v411 = vld [vmem:[#allocation7 + $0x490] sm:$0xff]
        %v412 = vld [vmem:[#allocation7 + $0x498] sm:$0xff]
        %v413 = vld [vmem:[#allocation7 + $0x4a0] sm:$0xff]
        %v414 = vld [vmem:[#allocation7 + $0x4a8] sm:$0xff]
        %v415 = vld [vmem:[#allocation7 + $0x4b0] sm:$0xff]
        %v416 = vld [vmem:[#allocation7 + $0x4b8] sm:$0xff]
        %v417 = vld [vmem:[#allocation7 + $0x4c0] sm:$0xff]
        %v418 = vld [vmem:[#allocation7 + $0x4c8] sm:$0xff]
        %v419 = vld [vmem:[#allocation7 + $0x4d0] sm:$0xff]
        %v420 = vld [vmem:[#allocation7 + $0x4d8] sm:$0xff]
        %v421 = vld [vmem:[#allocation7 + $0x4e0] sm:$0xff]
        %v422 = vld [vmem:[#allocation7 + $0x4e8] sm:$0xff]
        %v423 = vld [vmem:[#allocation7 + $0x4f0] sm:$0xff]
        %v424 = vld [vmem:[#allocation7 + $0x4f8] sm:$0xff]
        %v425 = vld [vmem:[#allocation7 + $0x500] sm:$0xff]
        %v426 = vld [vmem:[#allocation7 + $0x508] sm:$0xff]
        %v427 = vld [vmem:[#allocation7 + $0x510] sm:$0xff]
        %v428 = vld [vmem:[#allocation7 + $0x518] sm:$0xff]
        %v429 = vld [vmem:[#allocation7 + $0x520] sm:$0xff]
        %v430 = vld [vmem:[#allocation7 + $0x528] sm:$0xff]
        %v431 = vld [vmem:[#allocation7 + $0x530] sm:$0xff]
        %v432 = vld [vmem:[#allocation7 + $0x538] sm:$0xff]
        %v433 = vld [vmem:[#allocation7 + $0x540] sm:$0xff]
        %v434 = vld [vmem:[#allocation7 + $0x548] sm:$0xff]
        %v435 = vld [vmem:[#allocation7 + $0x550] sm:$0xff]
        %v436 = vld [vmem:[#allocation7 + $0x558] sm:$0xff]
        %v437 = vld [vmem:[#allocation7 + $0x560] sm:$0xff]
        %v438 = vld [vmem:[#allocation7 + $0x568] sm:$0xff]
        %v439 = vld [vmem:[#allocation7 + $0x570] sm:$0xff]
        %v440 = vld [vmem:[#allocation7 + $0x578] sm:$0xff]
        %v441 = vld [vmem:[#allocation7 + $0x580] sm:$0xff]
        %v442 = vld [vmem:[#allocation7 + $0x588] sm:$0xff]
        %v443 = vld [vmem:[#allocation7 + $0x590] sm:$0xff]
        %v444 = vld [vmem:[#allocation7 + $0x598] sm:$0xff]
        %v445 = vld [vmem:[#allocation7 + $0x5a0] sm:$0xff]
        %v446 = vld [vmem:[#allocation7 + $0x5a8] sm:$0xff]
        %v447 = vld [vmem:[#allocation7 + $0x5b0] sm:$0xff]
        %v448 = vld [vmem:[#allocation7 + $0x5b8] sm:$0xff]
        %v449 = vld [vmem:[#allocation7 + $0x5c0] sm:$0xff]
        %v450 = vld [vmem:[#allocation7 + $0x5c8] sm:$0xff]
        %v451 = vld [vmem:[#allocation7 + $0x5d0] sm:$0xff]
        %v452 = vld [vmem:[#allocation7 + $0x5d8] sm:$0xff]
        %v453 = vld [vmem:[#allocation7 + $0x5e0] sm:$0xff]
        %v454 = vld [vmem:[#allocation7 + $0x5e8] sm:$0xff]
        %v455 = vld [vmem:[#allocation7 + $0x5f0] sm:$0xff]
        %v456 = vld [vmem:[#allocation7 + $0x5f8] sm:$0xff]
        %v457 = vld [vmem:[#allocation7 + $0x600] sm:$0xff]
        %v458 = vld [vmem:[#allocation7 + $0x608] sm:$0xff]
        %v459 = vld [vmem:[#allocation7 + $0x610] sm:$0xff]
        %v460 = vld [vmem:[#allocation7 + $0x618] sm:$0xff]
        %v461 = vld [vmem:[#allocation7 + $0x620] sm:$0xff]
        %v462 = vld [vmem:[#allocation7 + $0x628] sm:$0xff]
        %v463 = vld [vmem:[#allocation7 + $0x630] sm:$0xff]
        %v464 = vld [vmem:[#allocation7 + $0x638] sm:$0xff]
        %v465 = vld [vmem:[#allocation7 + $0x640] sm:$0xff]
        %v466 = vld [vmem:[#allocation7 + $0x648] sm:$0xff]
        %v467 = vld [vmem:[#allocation7 + $0x650] sm:$0xff]
        %v468 = vld [vmem:[#allocation7 + $0x658] sm:$0xff]
        %v469 = vld [vmem:[#allocation7 + $0x660] sm:$0xff]
        %v470 = vld [vmem:[#allocation7 + $0x668] sm:$0xff]
        %v471 = vld [vmem:[#allocation7 + $0x670] sm:$0xff]
        %v472 = vld [vmem:[#allocation7 + $0x678] sm:$0xff]
        %v473 = vld [vmem:[#allocation7 + $0x680] sm:$0xff]
        %v474 = vld [vmem:[#allocation7 + $0x688] sm:$0xff]
        %v475 = vld [vmem:[#allocation7 + $0x690] sm:$0xff]
        %v476 = vld [vmem:[#allocation7 + $0x698] sm:$0xff]
        %v477 = vld [vmem:[#allocation7 + $0x6a0] sm:$0xff]
        %v478 = vld [vmem:[#allocation7 + $0x6a8] sm:$0xff]
        %v479 = vld [vmem:[#allocation7 + $0x6b0] sm:$0xff]
        %v480 = vld [vmem:[#allocation7 + $0x6b8] sm:$0xff]
        %v481 = vld [vmem:[#allocation7 + $0x6c0] sm:$0xff]
        %v482 = vld [vmem:[#allocation7 + $0x6c8] sm:$0xff]
        %v483 = vld [vmem:[#allocation7 + $0x6d0] sm:$0xff]
        %v484 = vld [vmem:[#allocation7 + $0x6d8] sm:$0xff]
        %v485 = vld [vmem:[#allocation7 + $0x6e0] sm:$0xff]
        %v486 = vld [vmem:[#allocation7 + $0x6e8] sm:$0xff]
        %v487 = vld [vmem:[#allocation7 + $0x6f0] sm:$0xff]
        %v488 = vld [vmem:[#allocation7 + $0x6f8] sm:$0xff]
        %v489 = vld [vmem:[#allocation7 + $0x700] sm:$0xff]
        %v490 = vld [vmem:[#allocation7 + $0x708] sm:$0xff]
        %v491 = vld [vmem:[#allocation7 + $0x710] sm:$0xff]
        %v492 = vld [vmem:[#allocation7 + $0x718] sm:$0xff]
        %v493 = vld [vmem:[#allocation7 + $0x720] sm:$0xff]
        %v494 = vld [vmem:[#allocation7 + $0x728] sm:$0xff]
        %v495 = vld [vmem:[#allocation7 + $0x730] sm:$0xff]
        %v496 = vld [vmem:[#allocation7 + $0x738] sm:$0xff]
        %v497 = vld [vmem:[#allocation7 + $0x740] sm:$0xff]
        %v498 = vld [vmem:[#allocation7 + $0x748] sm:$0xff]
        %v499 = vld [vmem:[#allocation7 + $0x750] sm:$0xff]
        %v500 = vld [vmem:[#allocation7 + $0x758] sm:$0xff]
        %v501 = vld [vmem:[#allocation7 + $0x760] sm:$0xff]
        %v502 = vld [vmem:[#allocation7 + $0x768] sm:$0xff]
        %v503 = vld [vmem:[#allocation7 + $0x770] sm:$0xff]
        %v504 = vld [vmem:[#allocation7 + $0x778] sm:$0xff]
        %v505 = vld [vmem:[#allocation7 + $0x780] sm:$0xff]
        %v506 = vld [vmem:[#allocation7 + $0x788] sm:$0xff]
        %v507 = vld [vmem:[#allocation7 + $0x790] sm:$0xff]
        %v508 = vld [vmem:[#allocation7 + $0x798] sm:$0xff]
        %v509 = vld [vmem:[#allocation7 + $0x7a0] sm:$0xff]
        %v510 = vld [vmem:[#allocation7 + $0x7a8] sm:$0xff]
        %v511 = vld [vmem:[#allocation7 + $0x7b0] sm:$0xff]
        %v512 = vld [vmem:[#allocation7 + $0x7b8] sm:$0xff]
        %v513 = vld [vmem:[#allocation7 + $0x7c0] sm:$0xff]
        %v514 = vld [vmem:[#allocation7 + $0x7c8] sm:$0xff]
        %v515 = vld [vmem:[#allocation7 + $0x7d0] sm:$0xff]
        %v516 = vld [vmem:[#allocation7 + $0x7d8] sm:$0xff]
        %v517 = vld [vmem:[#allocation7 + $0x7e0] sm:$0xff]
        %v518 = vld [vmem:[#allocation7 + $0x7e8] sm:$0xff]
        %v519 = vld [vmem:[#allocation7 + $0x7f0] sm:$0xff]
        %v520 = vld [vmem:[#allocation7 + $0x7f8] sm:$0xff]
        %v521 = vld [vmem:[#allocation9] sm:$0xff]
        %v522 = vld [vmem:[#allocation9 + $0x8] sm:$0xff]
        %v523 = vld [vmem:[%s3] sm:$0xf]
        %v525 = vlaneseq
        %v526 = vshrl.u32 %v525, 7
        %v527 = vsub.s32 0, %v526
        %v528 = vrot.slane %v523, %v527
        %v529 = vlaneseq
        %v530 = vshrl.u32 %v529, 7
        %v531 = vsub.s32 1, %v530
        %v532 = vrot.slane %v523, %v531
        %v533 = vlaneseq
        %v534 = vshrl.u32 %v533, 7
        %v535 = vsub.s32 2, %v534
        %v536 = vrot.slane %v523, %v535
        %v537 = vlaneseq
        %v538 = vshrl.u32 %v537, 7
        %v539 = vsub.s32 3, %v538
        %v540 = vrot.slane %v523, %v539
        %545 = vmatprep.subr.mxu0 %v326
        %546 = vmatpush1.xpose.msra.mxu0 %v325
        %547 = vmatprep.subr.mxu0 %v322
        %548 = vmatpush1.xpose.msra.mxu0 %v321
        %549 = vmatprep.subr.mxu0 %v318
        %550 = vmatpush1.xpose.msra.mxu0 %v317
        %551 = vmatprep.subr.mxu0 %v314
        %552 = vmatpush1.xpose.msra.mxu0 %v313
        %553 = vmatprep.subr.mxu0 %v310
        %554 = vmatpush1.xpose.msra.mxu0 %v309
        %555 = vmatprep.subr.mxu0 %v306
        %556 = vmatpush1.xpose.msra.mxu0 %v305
        %557 = vmatprep.subr.mxu0 %v302
        %558 = vmatpush1.xpose.msra.mxu0 %v301
        %559 = vmatprep.subr.mxu0 %v298
        %560 = vmatpush1.xpose.msra.mxu0 %v297
        %561 = vmatprep.subr.mxu0 %v294
        %562 = vmatpush1.xpose.msra.mxu0 %v293
        %563 = vmatprep.subr.mxu0 %v290
        %564 = vmatpush1.xpose.msra.mxu0 %v289
        %565 = vmatprep.subr.mxu0 %v286
        %566 = vmatpush1.xpose.msra.mxu0 %v285
        %567 = vmatprep.subr.mxu0 %v282
        %568 = vmatpush1.xpose.msra.mxu0 %v281
        %569 = vmatprep.subr.mxu0 %v278
        %570 = vmatpush1.xpose.msra.mxu0 %v277
        %571 = vmatprep.subr.mxu0 %v274
        %572 = vmatpush1.xpose.msra.mxu0 %v273
        %573 = vmatprep.subr.mxu0 %v270
        %574 = vmatpush1.xpose.msra.mxu0 %v269
        %575 = vmatprep.subr.mxu0 %v266
        %576 = vmatpush1.xpose.msra.mxu0 %v265
        %577 = vmatprep.subr.mxu0 %v390
        %578 = vmatpush2.xpose.msra.mxu0 %v389
        %579 = vmatprep.subr.mxu0 %v386
        %580 = vmatpush2.xpose.msra.mxu0 %v385
        %581 = vmatprep.subr.mxu0 %v382
        %582 = vmatpush2.xpose.msra.mxu0 %v381
        %583 = vmatprep.subr.mxu0 %v378
        %584 = vmatpush2.xpose.msra.mxu0 %v377
        %585 = vmatprep.subr.mxu0 %v374
        %586 = vmatpush2.xpose.msra.mxu0 %v373
        %587 = vmatprep.subr.mxu0 %v370
        %588 = vmatpush2.xpose.msra.mxu0 %v369
        %589 = vmatprep.subr.mxu0 %v366
        %590 = vmatpush2.xpose.msra.mxu0 %v365
        %591 = vmatprep.subr.mxu0 %v362
        %592 = vmatpush2.xpose.msra.mxu0 %v361
        %593 = vmatprep.subr.mxu0 %v358
        %594 = vmatpush2.xpose.msra.mxu0 %v357
        %595 = vmatprep.subr.mxu0 %v354
        %596 = vmatpush2.xpose.msra.mxu0 %v353
        %597 = vmatprep.subr.mxu0 %v350
        %598 = vmatpush2.xpose.msra.mxu0 %v349
        %599 = vmatprep.subr.mxu0 %v346
        %600 = vmatpush2.xpose.msra.mxu0 %v345
        %601 = vmatprep.subr.mxu0 %v342
        %602 = vmatpush2.xpose.msra.mxu0 %v341
        %603 = vmatprep.subr.mxu0 %v338
        %604 = vmatpush2.xpose.msra.mxu0 %v337
        %605 = vmatprep.subr.mxu0 %v334
        %606 = vmatpush2.xpose.msra.mxu0 %v333
        %607 = vmatprep.subr.mxu0 %v330
        %608 = vmatpush2.xpose.msra.mxu0 %v329
        %609 = vmatprep.mubr.f32.mxu0 %v262
        %610 = vmatmul.mubr.f32.gmra.mxu0 %v261
        %v611 = vpop.f32.mrf.mxu0
        %v612 = vadd.f32 %v528, %v611
        %v613 = vpop.f32.mrf.mxu0
        %v614 = vadd.f32 %v532, %v613
        %615 = vdwg.mxu0
        %616 = vmatprep.subr.mxu0 %v328
        %617 = vmatpush1.xpose.msra.mxu0 %v327
        %618 = vmatprep.subr.mxu0 %v324
        %619 = vmatpush1.xpose.msra.mxu0 %v323
        %620 = vmatprep.subr.mxu0 %v320
        %621 = vmatpush1.xpose.msra.mxu0 %v319
        %622 = vmatprep.subr.mxu0 %v316
        %623 = vmatpush1.xpose.msra.mxu0 %v315
        %624 = vmatprep.subr.mxu0 %v312
        %625 = vmatpush1.xpose.msra.mxu0 %v311
        %626 = vmatprep.subr.mxu0 %v308
        %627 = vmatpush1.xpose.msra.mxu0 %v307
        %628 = vmatprep.subr.mxu0 %v304
        %629 = vmatpush1.xpose.msra.mxu0 %v303
        %630 = vmatprep.subr.mxu0 %v300
        %631 = vmatpush1.xpose.msra.mxu0 %v299
        %632 = vmatprep.subr.mxu0 %v296
        %633 = vmatpush1.xpose.msra.mxu0 %v295
        %634 = vmatprep.subr.mxu0 %v292
        %635 = vmatpush1.xpose.msra.mxu0 %v291
        %636 = vmatprep.subr.mxu0 %v288
        %637 = vmatpush1.xpose.msra.mxu0 %v287
        %638 = vmatprep.subr.mxu0 %v284
        %639 = vmatpush1.xpose.msra.mxu0 %v283
        %640 = vmatprep.subr.mxu0 %v280
        %641 = vmatpush1.xpose.msra.mxu0 %v279
        %642 = vmatprep.subr.mxu0 %v276
        %643 = vmatpush1.xpose.msra.mxu0 %v275
        %644 = vmatprep.subr.mxu0 %v272
        %645 = vmatpush1.xpose.msra.mxu0 %v271
        %646 = vmatprep.subr.mxu0 %v268
        %647 = vmatpush1.xpose.msra.mxu0 %v267
        %648 = vmatprep.subr.mxu0 %v392
        %649 = vmatpush2.xpose.msra.mxu0 %v391
        %650 = vmatprep.subr.mxu0 %v388
        %651 = vmatpush2.xpose.msra.mxu0 %v387
        %652 = vmatprep.subr.mxu0 %v384
        %653 = vmatpush2.xpose.msra.mxu0 %v383
        %654 = vmatprep.subr.mxu0 %v380
        %655 = vmatpush2.xpose.msra.mxu0 %v379
        %656 = vmatprep.subr.mxu0 %v376
        %657 = vmatpush2.xpose.msra.mxu0 %v375
        %658 = vmatprep.subr.mxu0 %v372
        %659 = vmatpush2.xpose.msra.mxu0 %v371
        %660 = vmatprep.subr.mxu0 %v368
        %661 = vmatpush2.xpose.msra.mxu0 %v367
        %662 = vmatprep.subr.mxu0 %v364
        %663 = vmatpush2.xpose.msra.mxu0 %v363
        %664 = vmatprep.subr.mxu0 %v360
        %665 = vmatpush2.xpose.msra.mxu0 %v359
        %666 = vmatprep.subr.mxu0 %v356
        %667 = vmatpush2.xpose.msra.mxu0 %v355
        %668 = vmatprep.subr.mxu0 %v352
        %669 = vmatpush2.xpose.msra.mxu0 %v351
        %670 = vmatprep.subr.mxu0 %v348
        %671 = vmatpush2.xpose.msra.mxu0 %v347
        %672 = vmatprep.subr.mxu0 %v344
        %673 = vmatpush2.xpose.msra.mxu0 %v343
        %674 = vmatprep.subr.mxu0 %v340
        %675 = vmatpush2.xpose.msra.mxu0 %v339
        %676 = vmatprep.subr.mxu0 %v336
        %677 = vmatpush2.xpose.msra.mxu0 %v335
        %678 = vmatprep.subr.mxu0 %v332
        %679 = vmatpush2.xpose.msra.mxu0 %v331
        %680 = vmatprep.mubr.f32.mxu0 %v264
        %681 = vmatmul.mubr.f32.gmra.mxu0 %v263
        %v682 = vpop.f32.mrf.mxu0
        %v683 = vadd.f32 %v612, %v682
        %v684 = vpop.f32.mrf.mxu0
        %v685 = vadd.f32 %v614, %v684
        %686 = vdwg.mxu0
        %687 = vmatprep.subr.mxu0 %v454
        %688 = vmatpush1.xpose.msra.mxu0 %v453
        %689 = vmatprep.subr.mxu0 %v450
        %690 = vmatpush1.xpose.msra.mxu0 %v449
        %691 = vmatprep.subr.mxu0 %v446
        %692 = vmatpush1.xpose.msra.mxu0 %v445
        %693 = vmatprep.subr.mxu0 %v442
        %694 = vmatpush1.xpose.msra.mxu0 %v441
        %695 = vmatprep.subr.mxu0 %v438
        %696 = vmatpush1.xpose.msra.mxu0 %v437
        %697 = vmatprep.subr.mxu0 %v434
        %698 = vmatpush1.xpose.msra.mxu0 %v433
        %699 = vmatprep.subr.mxu0 %v430
        %700 = vmatpush1.xpose.msra.mxu0 %v429
        %701 = vmatprep.subr.mxu0 %v426
        %702 = vmatpush1.xpose.msra.mxu0 %v425
        %703 = vmatprep.subr.mxu0 %v422
        %704 = vmatpush1.xpose.msra.mxu0 %v421
        %705 = vmatprep.subr.mxu0 %v418
        %706 = vmatpush1.xpose.msra.mxu0 %v417
        %707 = vmatprep.subr.mxu0 %v414
        %708 = vmatpush1.xpose.msra.mxu0 %v413
        %709 = vmatprep.subr.mxu0 %v410
        %710 = vmatpush1.xpose.msra.mxu0 %v409
        %711 = vmatprep.subr.mxu0 %v406
        %712 = vmatpush1.xpose.msra.mxu0 %v405
        %713 = vmatprep.subr.mxu0 %v402
        %714 = vmatpush1.xpose.msra.mxu0 %v401
        %715 = vmatprep.subr.mxu0 %v398
        %716 = vmatpush1.xpose.msra.mxu0 %v397
        %717 = vmatprep.subr.mxu0 %v394
        %718 = vmatpush1.xpose.msra.mxu0 %v393
        %719 = vmatprep.subr.mxu0 %v518
        %720 = vmatpush2.xpose.msra.mxu0 %v517
        %721 = vmatprep.subr.mxu0 %v514
        %722 = vmatpush2.xpose.msra.mxu0 %v513
        %723 = vmatprep.subr.mxu0 %v510
        %724 = vmatpush2.xpose.msra.mxu0 %v509
        %725 = vmatprep.subr.mxu0 %v506
        %726 = vmatpush2.xpose.msra.mxu0 %v505
        %727 = vmatprep.subr.mxu0 %v502
        %728 = vmatpush2.xpose.msra.mxu0 %v501
        %729 = vmatprep.subr.mxu0 %v498
        %730 = vmatpush2.xpose.msra.mxu0 %v497
        %731 = vmatprep.subr.mxu0 %v494
        %732 = vmatpush2.xpose.msra.mxu0 %v493
        %733 = vmatprep.subr.mxu0 %v490
        %734 = vmatpush2.xpose.msra.mxu0 %v489
        %735 = vmatprep.subr.mxu0 %v486
        %736 = vmatpush2.xpose.msra.mxu0 %v485
        %737 = vmatprep.subr.mxu0 %v482
        %738 = vmatpush2.xpose.msra.mxu0 %v481
        %739 = vmatprep.subr.mxu0 %v478
        %740 = vmatpush2.xpose.msra.mxu0 %v477
        %741 = vmatprep.subr.mxu0 %v474
        %742 = vmatpush2.xpose.msra.mxu0 %v473
        %743 = vmatprep.subr.mxu0 %v470
        %744 = vmatpush2.xpose.msra.mxu0 %v469
        %745 = vmatprep.subr.mxu0 %v466
        %746 = vmatpush2.xpose.msra.mxu0 %v465
        %747 = vmatprep.subr.mxu0 %v462
        %748 = vmatpush2.xpose.msra.mxu0 %v461
        %749 = vmatprep.subr.mxu0 %v458
        %750 = vmatpush2.xpose.msra.mxu0 %v457
        %751 = vmatprep.mubr.f32.mxu0 %v262
        %752 = vmatmul.mubr.f32.gmra.mxu0 %v261
        %v753 = vpop.f32.mrf.mxu0
        %v754 = vadd.f32 %v536, %v753
        %v755 = vpop.f32.mrf.mxu0
        %v756 = vadd.f32 %v540, %v755
        %757 = vdwg.mxu0
        %758 = vmatprep.subr.mxu0 %v456
        %759 = vmatpush1.xpose.msra.mxu0 %v455
        %760 = vmatprep.subr.mxu0 %v452
        %761 = vmatpush1.xpose.msra.mxu0 %v451
        %762 = vmatprep.subr.mxu0 %v448
        %763 = vmatpush1.xpose.msra.mxu0 %v447
        %764 = vmatprep.subr.mxu0 %v444
        %765 = vmatpush1.xpose.msra.mxu0 %v443
        %766 = vmatprep.subr.mxu0 %v440
        %767 = vmatpush1.xpose.msra.mxu0 %v439
        %768 = vmatprep.subr.mxu0 %v436
        %769 = vmatpush1.xpose.msra.mxu0 %v435
        %770 = vmatprep.subr.mxu0 %v432
        %771 = vmatpush1.xpose.msra.mxu0 %v431
        %772 = vmatprep.subr.mxu0 %v428
        %773 = vmatpush1.xpose.msra.mxu0 %v427
        %774 = vmatprep.subr.mxu0 %v424
        %775 = vmatpush1.xpose.msra.mxu0 %v423
        %776 = vmatprep.subr.mxu0 %v420
        %777 = vmatpush1.xpose.msra.mxu0 %v419
        %778 = vmatprep.subr.mxu0 %v416
        %779 = vmatpush1.xpose.msra.mxu0 %v415
        %780 = vmatprep.subr.mxu0 %v412
        %781 = vmatpush1.xpose.msra.mxu0 %v411
        %782 = vmatprep.subr.mxu0 %v408
        %783 = vmatpush1.xpose.msra.mxu0 %v407
        %784 = vmatprep.subr.mxu0 %v404
        %785 = vmatpush1.xpose.msra.mxu0 %v403
        %786 = vmatprep.subr.mxu0 %v400
        %787 = vmatpush1.xpose.msra.mxu0 %v399
        %788 = vmatprep.subr.mxu0 %v396
        %789 = vmatpush1.xpose.msra.mxu0 %v395
        %790 = vmatprep.subr.mxu0 %v520
        %791 = vmatpush2.xpose.msra.mxu0 %v519
        %792 = vmatprep.subr.mxu0 %v516
        %793 = vmatpush2.xpose.msra.mxu0 %v515
        %794 = vmatprep.subr.mxu0 %v512
        %795 = vmatpush2.xpose.msra.mxu0 %v511
        %796 = vmatprep.subr.mxu0 %v508
        %797 = vmatpush2.xpose.msra.mxu0 %v507
        %798 = vmatprep.subr.mxu0 %v504
        %799 = vmatpush2.xpose.msra.mxu0 %v503
        %800 = vmatprep.subr.mxu0 %v500
        %801 = vmatpush2.xpose.msra.mxu0 %v499
        %802 = vmatprep.subr.mxu0 %v496
        %803 = vmatpush2.xpose.msra.mxu0 %v495
        %804 = vmatprep.subr.mxu0 %v492
        %805 = vmatpush2.xpose.msra.mxu0 %v491
        %806 = vmatprep.subr.mxu0 %v488
        %807 = vmatpush2.xpose.msra.mxu0 %v487
        %808 = vmatprep.subr.mxu0 %v484
        %809 = vmatpush2.xpose.msra.mxu0 %v483
        %810 = vmatprep.subr.mxu0 %v480
        %811 = vmatpush2.xpose.msra.mxu0 %v479
        %812 = vmatprep.subr.mxu0 %v476
        %813 = vmatpush2.xpose.msra.mxu0 %v475
        %814 = vmatprep.subr.mxu0 %v472
        %815 = vmatpush2.xpose.msra.mxu0 %v471
        %816 = vmatprep.subr.mxu0 %v468
        %817 = vmatpush2.xpose.msra.mxu0 %v467
        %818 = vmatprep.subr.mxu0 %v464
        %819 = vmatpush2.xpose.msra.mxu0 %v463
        %820 = vmatprep.subr.mxu0 %v460
        %821 = vmatpush2.xpose.msra.mxu0 %v459
        %822 = vmatprep.mubr.f32.mxu0 %v264
        %823 = vmatmul.mubr.f32.gmra.mxu0 %v263
        %v824 = vpop.f32.mrf.mxu0
        %v825 = vadd.f32 %v754, %v824
        %v826 = vpop.f32.mrf.mxu0
        %v827 = vadd.f32 %v756, %v826
        %828 = vdwg.mxu0
        %v829 = vld [vmem:[%s5] sm:$0x1]
        %v831 = vlaneseq
        %v832 = vshrl.u32 %v831, 7
        %v833 = vsub.s32 0, %v832
        %v834 = vrot.slane %v829, %v833
        %v838 = vcombine.high %v521, %v521
        %v839 = vcombine.high %v522, %v522
        %842 = vmatprep.subr.mxu0 0.0
        %843 = vmatpush1.xpose.msra.mxu0 0.0
        %844 = vmatprep.subr.mxu0 0.0
        %845 = vmatpush1.xpose.msra.mxu0 0.0
        %846 = vmatprep.subr.mxu0 0.0
        %847 = vmatpush1.xpose.msra.mxu0 0.0
        %848 = vmatprep.subr.mxu0 0.0
        %849 = vmatpush1.xpose.msra.mxu0 0.0
        %850 = vmatprep.subr.mxu0 0.0
        %851 = vmatpush1.xpose.msra.mxu0 0.0
        %852 = vmatprep.subr.mxu0 0.0
        %853 = vmatpush1.xpose.msra.mxu0 0.0
        %854 = vmatprep.subr.mxu0 0.0
        %855 = vmatpush1.xpose.msra.mxu0 0.0
        %856 = vmatprep.subr.mxu0 0.0
        %857 = vmatpush1.xpose.msra.mxu0 0.0
        %858 = vmatprep.subr.mxu0 0.0
        %859 = vmatpush1.xpose.msra.mxu0 0.0
        %860 = vmatprep.subr.mxu0 0.0
        %861 = vmatpush1.xpose.msra.mxu0 0.0
        %862 = vmatprep.subr.mxu0 0.0
        %863 = vmatpush1.xpose.msra.mxu0 0.0
        %864 = vmatprep.subr.mxu0 0.0
        %865 = vmatpush1.xpose.msra.mxu0 0.0
        %866 = vmatprep.subr.mxu0 0.0
        %867 = vmatpush1.xpose.msra.mxu0 0.0
        %868 = vmatprep.subr.mxu0 0.0
        %869 = vmatpush1.xpose.msra.mxu0 0.0
        %870 = vmatprep.subr.mxu0 0.0
        %871 = vmatpush1.xpose.msra.mxu0 0.0
        %872 = vmatprep.subr.mxu0 %v838
        %873 = vmatpush1.xpose.msra.mxu0 %v521
        %874 = vmatprep.subr.mxu0 0.0
        %875 = vmatpush2.xpose.msra.mxu0 0.0
        %876 = vmatprep.subr.mxu0 0.0
        %877 = vmatpush2.xpose.msra.mxu0 0.0
        %878 = vmatprep.subr.mxu0 0.0
        %879 = vmatpush2.xpose.msra.mxu0 0.0
        %880 = vmatprep.subr.mxu0 0.0
        %881 = vmatpush2.xpose.msra.mxu0 0.0
        %882 = vmatprep.subr.mxu0 0.0
        %883 = vmatpush2.xpose.msra.mxu0 0.0
        %884 = vmatprep.subr.mxu0 0.0
        %885 = vmatpush2.xpose.msra.mxu0 0.0
        %886 = vmatprep.subr.mxu0 0.0
        %887 = vmatpush2.xpose.msra.mxu0 0.0
        %888 = vmatprep.subr.mxu0 0.0
        %889 = vmatpush2.xpose.msra.mxu0 0.0
        %890 = vmatprep.subr.mxu0 0.0
        %891 = vmatpush2.xpose.msra.mxu0 0.0
        %892 = vmatprep.subr.mxu0 0.0
        %893 = vmatpush2.xpose.msra.mxu0 0.0
        %894 = vmatprep.subr.mxu0 0.0
        %895 = vmatpush2.xpose.msra.mxu0 0.0
        %896 = vmatprep.subr.mxu0 0.0
        %897 = vmatpush2.xpose.msra.mxu0 0.0
        %898 = vmatprep.subr.mxu0 0.0
        %899 = vmatpush2.xpose.msra.mxu0 0.0
        %900 = vmatprep.subr.mxu0 0.0
        %901 = vmatpush2.xpose.msra.mxu0 0.0
        %902 = vmatprep.subr.mxu0 0.0
        %903 = vmatpush2.xpose.msra.mxu0 0.0
        %904 = vmatprep.subr.mxu0 0.0
        %905 = vmatpush2.xpose.msra.mxu0 0.0
        %906 = vmatprep.mubr.f32.mxu0 %v685
        %907 = vmatmul.mubr.f32.gmra.mxu0 %v683
        %v908 = vpop.f32.mrf.mxu0
        %v909 = vadd.f32 %v834, %v908
        %v910 = vpop.f32.mrf.mxu0
        %911 = vdwg.mxu0
        %912 = vmatprep.subr.mxu0 0.0
        %913 = vmatpush1.xpose.msra.mxu0 0.0
        %914 = vmatprep.subr.mxu0 0.0
        %915 = vmatpush1.xpose.msra.mxu0 0.0
        %916 = vmatprep.subr.mxu0 0.0
        %917 = vmatpush1.xpose.msra.mxu0 0.0
        %918 = vmatprep.subr.mxu0 0.0
        %919 = vmatpush1.xpose.msra.mxu0 0.0
        %920 = vmatprep.subr.mxu0 0.0
        %921 = vmatpush1.xpose.msra.mxu0 0.0
        %922 = vmatprep.subr.mxu0 0.0
        %923 = vmatpush1.xpose.msra.mxu0 0.0
        %924 = vmatprep.subr.mxu0 0.0
        %925 = vmatpush1.xpose.msra.mxu0 0.0
        %926 = vmatprep.subr.mxu0 0.0
        %927 = vmatpush1.xpose.msra.mxu0 0.0
        %928 = vmatprep.subr.mxu0 0.0
        %929 = vmatpush1.xpose.msra.mxu0 0.0
        %930 = vmatprep.subr.mxu0 0.0
        %931 = vmatpush1.xpose.msra.mxu0 0.0
        %932 = vmatprep.subr.mxu0 0.0
        %933 = vmatpush1.xpose.msra.mxu0 0.0
        %934 = vmatprep.subr.mxu0 0.0
        %935 = vmatpush1.xpose.msra.mxu0 0.0
        %936 = vmatprep.subr.mxu0 0.0
        %937 = vmatpush1.xpose.msra.mxu0 0.0
        %938 = vmatprep.subr.mxu0 0.0
        %939 = vmatpush1.xpose.msra.mxu0 0.0
        %940 = vmatprep.subr.mxu0 0.0
        %941 = vmatpush1.xpose.msra.mxu0 0.0
        %942 = vmatprep.subr.mxu0 %v839
        %943 = vmatpush1.xpose.msra.mxu0 %v522
        %944 = vmatprep.subr.mxu0 0.0
        %945 = vmatpush2.xpose.msra.mxu0 0.0
        %946 = vmatprep.subr.mxu0 0.0
        %947 = vmatpush2.xpose.msra.mxu0 0.0
        %948 = vmatprep.subr.mxu0 0.0
        %949 = vmatpush2.xpose.msra.mxu0 0.0
        %950 = vmatprep.subr.mxu0 0.0
        %951 = vmatpush2.xpose.msra.mxu0 0.0
        %952 = vmatprep.subr.mxu0 0.0
        %953 = vmatpush2.xpose.msra.mxu0 0.0
        %954 = vmatprep.subr.mxu0 0.0
        %955 = vmatpush2.xpose.msra.mxu0 0.0
        %956 = vmatprep.subr.mxu0 0.0
        %957 = vmatpush2.xpose.msra.mxu0 0.0
        %958 = vmatprep.subr.mxu0 0.0
        %959 = vmatpush2.xpose.msra.mxu0 0.0
        %960 = vmatprep.subr.mxu0 0.0
        %961 = vmatpush2.xpose.msra.mxu0 0.0
        %962 = vmatprep.subr.mxu0 0.0
        %963 = vmatpush2.xpose.msra.mxu0 0.0
        %964 = vmatprep.subr.mxu0 0.0
        %965 = vmatpush2.xpose.msra.mxu0 0.0
        %966 = vmatprep.subr.mxu0 0.0
        %967 = vmatpush2.xpose.msra.mxu0 0.0
        %968 = vmatprep.subr.mxu0 0.0
        %969 = vmatpush2.xpose.msra.mxu0 0.0
        %970 = vmatprep.subr.mxu0 0.0
        %971 = vmatpush2.xpose.msra.mxu0 0.0
        %972 = vmatprep.subr.mxu0 0.0
        %973 = vmatpush2.xpose.msra.mxu0 0.0
        %974 = vmatprep.subr.mxu0 0.0
        %975 = vmatpush2.xpose.msra.mxu0 0.0
        %976 = vmatprep.mubr.f32.mxu0 %v827
        %977 = vmatmul.mubr.f32.gmra.mxu0 %v825
        %v978 = vpop.f32.mrf.mxu0
        %v979 = vadd.f32 %v909, %v978
        %v980 = vpop.f32.mrf.mxu0
        %981 = vdwg.mxu0
        %v982 = vmax.f32 %v979, 0.0
        %v983 = vxor.u32 %v982, 2147483648
        %v984 = vmul.f32 %v983, 1.442695
        %v985 = vpow.pop %v984
        %v986 = vadd.f32 %v985, 1.0
        %v987 = vrcp.pop %v986
        %v988 = vmul.f32 1.0, %v987
        %990 = vset.pattern.permute.xlu0 0
        %991 = vperm.xlu0 %990, %v988
        %v992 = vpop.permute.xlu0 %991
        %v994 = vmul.f32 %v992, %v261
        %v995 = vadd.f32 %v994, 0.0
        %996 = vset.pattern.permute.xlu0 1
        %997 = vperm.xlu0 %996, %v988
        %v998 = vpop.permute.xlu0 %997
        %v1000 = vmul.f32 %v998, %v262
        %v1001 = vadd.f32 %v995, %v1000
        %1002 = vset.pattern.permute.xlu0 2
        %1003 = vperm.xlu0 %1002, %v988
        %v1004 = vpop.permute.xlu0 %1003
        %v1006 = vmul.f32 %v1004, %v263
        %v1007 = vadd.f32 %v1001, %v1006
        %1008 = vset.pattern.permute.xlu0 3
        %1009 = vperm.xlu0 %1008, %v988
        %v1010 = vpop.permute.xlu0 %1009
        %v1012 = vmul.f32 %v1010, %v264
        %v1013 = vadd.f32 %v1007, %v1012
        %s1014 = sld [smem:[#allocation3 + %s26]]
        %s1015 = scvt.s32.f32 %s1014
        %s1016 = smul.f32 %s1015, 4.0
        %v1017 = vrot.slane %v1013, 4
        %v1018 = vadd.f32 %v1013, %v1017
        %v1019 = vrot.slane %v1018, 2
        %v1020 = vadd.f32 %v1018, %v1019
        %v1021 = vrot.slane %v1020, 1
        %v1022 = vadd.f32 %v1020, %v1021
        %v1023 = vstv %s1016
        %v1024 = vrcp.pop %v1023
        %v1025 = vmul.f32 %v1022, %v1024
        %v1026 = vlaneseq
        %v1027 = vshrl.u32 %v1026, 7
        %p1028 = scmp.eq.s32.totalorder %s26, 0
        // Predicated region
        $region53: #{tpu_custom_call.1} parent=39 // pred_check
          %p1029 = pneg %p1028
        $region54: #{tpu_custom_call.1} parent=39 // pred_check_branch
          %1031 = sbr.rel (%p1029) target = $region56
        $region55: #{tpu_custom_call.1} parent=39 // pred_region
          %1032 = vst [vmem:[#allocation10] sm:$0x3] 0.0
        $region56: #{tpu_custom_call.1} parent=39 // pred_fallthru
          _
        %v1033 = vstv %s26
        %vm1034 = vcmp.eq.s32.totalorder %v1027, %v1033
        %v1035 = vld [vmem:[#allocation10] sm:$0x3]
        %v1036 = vsel %vm1034, %v1025, %v1035
        %1037 = vst [vmem:[#allocation10] sm:$0x3] %v1036
        // Predicated region
        $region57: #{tpu_custom_call.1} parent=39 // pred_check
          %p1038 = pneg %p149
        $region58: #{tpu_custom_call.1} parent=39 // pred_check_branch
          %1040 = sbr.rel (%p1038) target = $region60
        $region59: #{tpu_custom_call.1} parent=39 // pred_region
          %s1042 = ssub.s32 32, 32
          %1043 = vsyncadd [#allocation6], %s1042
          %s1045 = sshll.u32 [#allocation10], 4
          %s1046 = int_to_ptr.vmem [resolvable:$true] %s1045
          %1048 = dma.vmem_to_hbm [thread:$0]  %s1046, 32, %s6, [#allocation6]
        $region60: #{tpu_custom_call.1} parent=39 // pred_fallthru
          _
        // Predicated region
        $region61: #{tpu_custom_call.1} parent=39 // pred_check
          %p1049 = pneg %p149
        $region62: #{tpu_custom_call.1} parent=39 // pred_check_branch
          %1051 = sbr.rel (%p1049) target = $region64
        $region63: #{tpu_custom_call.1} parent=39 // pred_region
          %1052 = dma.done [#allocation6], 32
        $region64: #{tpu_custom_call.1} parent=39 // pred_fallthru
          _
      $region40: #{tpu_custom_call.1} parent=5 // pred_fallthru
        _
      %p1053 = scmp.le.s32.totalorder 2, %s21
      // Predicated region
      $region65: #{tpu_custom_call.1} parent=5 // pred_check
        %p1054 = pneg %p1053
      $region66: #{tpu_custom_call.1} parent=5 // pred_check_branch
        %1056 = sbr.rel (%p1054) target = $region68
      $region67: #{tpu_custom_call.1} parent=5 // pred_region
        %s1057 = ssub.s32 %s21, 2
      $region68: #{tpu_custom_call.1} parent=5 // pred_fallthru
        _
    $region6: #{tpu_custom_call.1} parent=1 // loop_footer
      %s25 = sadd.s32 1, %s21
    $region7: #{tpu_custom_call.1} parent=1 // loop_footer_branch
      %20 = sbr.rel target = $region3
    $region8: #{tpu_custom_call.1} parent=1 // loop_exit
      _
    %1058 = vsyncpa [#allocation5], 1
    %s1059 = scalar_lea.sflag [#allocation5], 1
    %1060 = vsyncpa %s1059, 1
    %1061 = vsyncpa [#allocation8], 1
    %1062 = vsyncpa [#allocation6], 1
    %s1063 = scalar_lea.sflag [#allocation6], 1
    %1064 = vsyncpa %s1063, 1

</llo_original>
